<compile_context>
chip_gen: v7x
topology: tpu7x:2x2x1
jax: 0.10.0
libtpu: 0.0.40
codegen_flags: <defaults>
</compile_context>

<pallas_src>
import functools

import jax
import jax.numpy as jnp
from jax.experimental import pallas as pl
from jax.experimental.pallas import tpu as pltpu


def bilstm_tagger_kernel(embcat_ref,   # [T*BT, 2E] bf16  row t*BT+b = [x_t | x_{T-1-t}]
                         wih_ref,      # [2E, 8H]  bf16   block-diag, gate-grouped cols
                         bih_ref,      # [1, 8H]   f32    combined biases, gate-grouped
                         whh_ref,      # [2H, 8H]  bf16   block-diag, gate-grouped cols
                         wfc_ref,      # [2H, NP]  bf16
                         bfc_ref,      # [1, NP]   f32
                         out_ref,      # [T*BT, NP] f32
                         xall_ref,     # scratch [T*BT, 8H] f32  hoisted input projections
                         hist_ref,     # scratch [T*BT, 2H] f32  merged fwd/bwd history
                         *, T, BT, H):
    H2, H4, H6, H8 = 2 * H, 4 * H, 6 * H, 8 * H

    # ---- Prologue: one bf16 matmul for both directions' input projections. ----
    xall_ref[...] = (
        jnp.dot(embcat_ref[...], wih_ref[...], preferred_element_type=jnp.float32)
        + bih_ref[...])

    # Lane mask selecting the g-gate block (tanh); everything else is sigmoid.
    lane = jax.lax.broadcasted_iota(jnp.int32, (BT, H8), 1)
    tanh_mask = (lane >= H4) & (lane < H6)

    # Hoist the loop-invariant recurrent weight out of the T-step chain.
    whh = whh_ref[...]                                  # [2H, 8H] bf16

    def step(t, carry):
        h, c = carry                                    # [BT, 2H] f32: [fwd | bwd]
        row = pl.multiple_of(t * BT, BT)
        x_t = xall_ref[pl.ds(row, BT), :]               # [BT, 8H] f32
        gates = (jnp.dot(h.astype(jnp.bfloat16), whh,
                         preferred_element_type=jnp.float32)
                 + x_t)                                 # [BT, 8H] f32
        # tanh(x) = 2*sigmoid(2x) - 1: single EUP sigmoid pass over the 8H tile.
        pre = jnp.where(tanh_mask, gates * 2.0, gates)
        s = jax.nn.sigmoid(pre)
        act = jnp.where(tanh_mask, s * 2.0 - 1.0, s)
        i_g = act[:, 0:H2]                              # [i_f | i_b]
        f_g = act[:, H2:H4]                             # [f_f | f_b]
        g_g = act[:, H4:H6]                             # [g_f | g_b]
        o_g = act[:, H6:H8]                             # [o_f | o_b]
        c_new = f_g * c + i_g * g_g                     # [BT, 2H]
        h_new = o_g * jnp.tanh(c_new)                   # [BT, 2H] = [h_f(t) | h_b(T-1-t)]
        # Merged history: forward half at time t, backward half at time T-1-t.
        rrow = pl.multiple_of((T - 1 - t) * BT, BT)
        hist_ref[pl.ds(row, BT), :H] = h_new[:, :H]
        hist_ref[pl.ds(rrow, BT), H:] = h_new[:, H:]
        return h_new, c_new

    h0 = jnp.zeros((BT, H2), jnp.float32)
    c0 = jnp.zeros((BT, H2), jnp.float32)
    jax.lax.fori_loop(0, T, step, (h0, c0), unroll=min(T, 8))

    # ---- Epilogue: one matmul over the merged history, lane-dense store. ----
    out_ref[...] = (
        jnp.dot(hist_ref[...].astype(jnp.bfloat16), wfc_ref[...],
                preferred_element_type=jnp.float32)
        + bfc_ref[...])


def _gate_grouped_blockdiag(w_f, w_b, H):
    """w_f: [Kf, 4H], w_b: [Kb, 4H] in PyTorch gate order (i,f,g,o).
    Returns [Kf+Kb, 8H] block-diagonal weight with columns grouped as
    [i_f,i_b, f_f,f_b, g_f,g_b, o_f,o_b]."""
    Kf, Kb = w_f.shape[0], w_b.shape[0]
    cols = []
    for k in range(4):
        cols.append(jnp.concatenate(
            [w_f[:, k * H:(k + 1) * H], jnp.zeros((Kb, H), w_f.dtype)], axis=0))
        cols.append(jnp.concatenate(
            [jnp.zeros((Kf, H), w_b.dtype), w_b[:, k * H:(k + 1) * H]], axis=0))
    return jnp.concatenate(cols, axis=1)


def _gate_grouped_bias(b_f, b_b, H):
    cols = []
    for k in range(4):
        cols.append(b_f[:, k * H:(k + 1) * H])
        cols.append(b_b[:, k * H:(k + 1) * H])
    return jnp.concatenate(cols, axis=1)               # [1, 8H]


def bilstm_tagger(x_ids, params, *, max_batch_tile=128):
    """x_ids: [B, T] int32 token ids. Returns [B, T, num_tags] float32."""
    emb_table = params["embedding"]                    # [num_characters, E]
    B, T = x_ids.shape
    E = emb_table.shape[1]
    H = params["whh_f"].shape[0]
    num_tags = params["b_fc"].shape[-1]

    # Batch tiling: fill the MXU M dimension (up to 128 rows per tile) and put
    # the remaining tiles on a parallel grid axis (v7x: 2 TensorCores).
    B8 = ((B + 7) // 8) * 8
    BT = min(B8, max_batch_tile)
    NB = -(-B8 // BT)
    Bp = NB * BT
    NP = ((num_tags + 127) // 128) * 128               # pad tags to lane width

    # ---- Glue: embedding lookup (gather) + static weight packing. ----
    # TODO(synk): embedding gather stays in plain JAX; an in-kernel DMA gather
    # is possible but not worthwhile at these table sizes.
    emb = emb_table[x_ids]                             # [B, T, E]
    emb_tbe = jnp.transpose(emb, (1, 0, 2))            # [T, B, E]
    emb_tbe = jnp.pad(emb_tbe, ((0, 0), (0, Bp - B), (0, 0)))
    # Row (t, b) carries the forward input x_t and the backward input x_{T-1-t}.
    # TODO(synk): this duplicates input bytes / prologue FLOPs (block-diag Wih);
    # negligible at E=32, split into two E-wide matmuls for production E.
    emb_cat = jnp.concatenate([emb_tbe, emb_tbe[::-1]], axis=-1)   # [T, Bp, 2E]
    emb_cat = (emb_cat.reshape(T, NB, BT, 2 * E)
               .transpose(1, 0, 2, 3)
               .reshape(NB, T * BT, 2 * E)
               .astype(jnp.bfloat16))

    wih_blk = _gate_grouped_blockdiag(
        params["wih_f"], params["wih_b"], H).astype(jnp.bfloat16)  # [2E, 8H]
    whh_blk = _gate_grouped_blockdiag(
        params["whh_f"], params["whh_b"], H).astype(jnp.bfloat16)  # [2H, 8H]
    b_cat = _gate_grouped_bias(params["b_f"], params["b_b"], H)    # [1, 8H] f32

    wfc = jnp.pad(params["w_fc"],
                  ((0, 0), (0, NP - num_tags))).astype(jnp.bfloat16)  # [2H, NP]
    bfc = jnp.pad(params["b_fc"], ((0, 0), (0, NP - num_tags)))       # [1, NP]

    kernel = functools.partial(bilstm_tagger_kernel, T=T, BT=BT, H=H)

    # Explicit VMEM budget (v7x: 64 MiB/TC, default scoped limit is lower).
    def nbytes(shape, dt):
        n = 1
        for d in shape:
            n *= int(d)
        return n * jnp.dtype(dt).itemsize

    resident = (
        2 * nbytes((T * BT, 2 * E), jnp.bfloat16)      # emb_cat block (dbl-buffered)
        + 2 * nbytes((2 * E, 8 * H), jnp.bfloat16)     # wih
        + 2 * nbytes((8, 8 * H), jnp.float32)          # bias (sublane-padded)
        + 2 * nbytes((2 * H, 8 * H), jnp.bfloat16)     # whh
        + 2 * nbytes((2 * H, NP), jnp.bfloat16)        # wfc
        + 2 * nbytes((8, NP), jnp.float32)             # bfc
        + 2 * nbytes((T * BT, NP), jnp.float32)        # out block
        + nbytes((T * BT, 8 * H), jnp.float32)         # xall scratch
        + nbytes((T * BT, 2 * H), jnp.float32))        # hist scratch
    vmem_limit = int(min(max(2 * resident + (4 << 20), 16 << 20), 96 << 20))

    out_flat = pl.pallas_call(
        kernel,
        out_shape=jax.ShapeDtypeStruct((NB, T * BT, NP), jnp.float32),
        grid=(NB,),
        in_specs=[
            pl.BlockSpec((None, T * BT, 2 * E), lambda nb: (nb, 0, 0)),
            pl.BlockSpec((2 * E, 8 * H), lambda nb: (0, 0)),
            pl.BlockSpec((1, 8 * H), lambda nb: (0, 0)),
            pl.BlockSpec((2 * H, 8 * H), lambda nb: (0, 0)),
            pl.BlockSpec((2 * H, NP), lambda nb: (0, 0)),
            pl.BlockSpec((1, NP), lambda nb: (0, 0)),
        ],
        out_specs=pl.BlockSpec((None, T * BT, NP), lambda nb: (nb, 0, 0)),
        scratch_shapes=[
            pltpu.VMEM((T * BT, 8 * H), jnp.float32),  # hoisted input projections
            pltpu.VMEM((T * BT, 2 * H), jnp.float32),  # merged fwd/bwd state history
        ],
        compiler_params=pltpu.CompilerParams(
            dimension_semantics=("parallel",),
            vmem_limit_bytes=vmem_limit),
    )(emb_cat, wih_blk, b_cat, whh_blk, wfc, bfc)

    out = (out_flat.reshape(NB, T, BT, NP)
           .transpose(1, 0, 2, 3)
           .reshape(T, Bp, NP)[:, :B, :num_tags])          # un-pad
    return jnp.transpose(out, (1, 0, 2))                   # [B, T, num_tags]


def bilstm_tagger_reference(x_ids, params):
    """Pure-JAX f32 reference with the original module semantics."""
    emb = params["embedding"][x_ids]                   # [B, T, E]
    B, T, E = emb.shape
    H = params["whh_f"].shape[0]

    def run_dir(wih, whh, b, reverse):
        h = jnp.zeros((B, H), jnp.float32)
        c = jnp.zeros((B, H), jnp.float32)
        outs = [None] * T
        order = range(T - 1, -1, -1) if reverse else range(T)
        for t in order:
            x_t = emb[:, t, :]
            gates = x_t @ wih + h @ whh + b
            i = jax.nn.sigmoid(gates[:, 0 * H:1 * H])
            f = jax.nn.sigmoid(gates[:, 1 * H:2 * H])
            g = jnp.tanh(gates[:, 2 * H:3 * H])
            o = jax.nn.sigmoid(gates[:, 3 * H:4 * H])
            c = f * c + i * g
            h = o * jnp.tanh(c)
            outs[t] = h
        return jnp.stack(outs, axis=1)                 # [B, T, H]

    h_f = run_dir(params["wih_f"], params["whh_f"], params["b_f"], False)
    h_b = run_dir(params["wih_b"], params["whh_b"], params["b_b"], True)
    cat = jnp.concatenate([h_f, h_b], axis=-1)         # [B, T, 2H]
    return cat @ params["w_fc"] + params["b_fc"]       # [B, T, num_tags]


def init_params(key, num_characters, num_tags, embedding_dim, hidden_dim):
    E, H = embedding_dim, hidden_dim
    ks = jax.random.split(key, 12)
    u = lambda k, shape, s: jax.random.uniform(k, shape, jnp.float32, -s, s)
    bound_lstm = 1.0 / jnp.sqrt(H)
    bound_fc = 1.0 / jnp.sqrt(2 * H)
    return {
        "embedding": jax.random.normal(ks[0], (num_characters, E), jnp.float32),
        # Pre-transposed LSTM weights: W_ih^T [E, 4H], W_hh^T [H, 4H];
        # combined bias (b_ih + b_hh) as [1, 4H]; PyTorch gate order (i, f, g, o).
        "wih_f": u(ks[1], (E, 4 * H), bound_lstm),
        "whh_f": u(ks[2], (H, 4 * H), bound_lstm),
        "b_f": u(ks[3], (1, 4 * H), bound_lstm) + u(ks[4], (1, 4 * H), bound_lstm),
        "wih_b": u(ks[5], (E, 4 * H), bound_lstm),
        "whh_b": u(ks[6], (H, 4 * H), bound_lstm),
        "b_b": u(ks[7], (1, 4 * H), bound_lstm) + u(ks[8], (1, 4 * H), bound_lstm),
        # FC: W^T [2H, num_tags], bias [1, num_tags].
        "w_fc": u(ks[9], (2 * H, num_tags), bound_fc),
        "b_fc": u(ks[10], (1, num_tags), bound_fc),
    }


if __name__ == "__main__":
    num_characters = 64
    num_tags = 16
    embedding_dim = 32
    hidden_dim = 32
    B, T = 2, 8

    key = jax.random.PRNGKey(0)
    k_param, k_x = jax.random.split(key)
    params = init_params(k_param, num_characters, num_tags, embedding_dim, hidden_dim)
    x_ids = jax.random.randint(k_x, (B, T), 0, num_characters, dtype=jnp.int32)

    out = jax.block_until_ready(bilstm_tagger(x_ids, params))
    ref = jax.block_until_ready(bilstm_tagger_reference(x_ids, params))

    assert out.shape == (B, T, num_tags), out.shape
    # bf16 MXU operands (f32 accumulation) -> relaxed tolerance vs f32 reference.
    max_err = float(jnp.max(jnp.abs(out - ref)))
    assert jnp.allclose(out, ref, atol=5e-2, rtol=2e-2), max_err
    print("KERNEL_OK")
</pallas_src>

<mosaic_0001>
module attributes {stable_mosaic.version = 11 : i64} {
  func.func @bilstm_tagger_kernel(%arg0: i32, %arg1: memref<1x64x64xbf16, #tpu.memory_space<vmem>>, %arg2: memref<64x256xbf16, #tpu.memory_space<vmem>>, %arg3: memref<1x256xf32, #tpu.memory_space<vmem>>, %arg4: memref<64x256xbf16, #tpu.memory_space<vmem>>, %arg5: memref<64x128xbf16, #tpu.memory_space<vmem>>, %arg6: memref<1x128xf32, #tpu.memory_space<vmem>>, %arg7: memref<1x64x128xf32, #tpu.memory_space<vmem>>, %arg8: memref<64x256xf32, #tpu.memory_space<vmem>>, %arg9: memref<64x64xf32, #tpu.memory_space<vmem>>) attributes {dimension_semantics = [#tpu.dimension_semantics<parallel>], iteration_bounds = array<i64: 1>, scalar_prefetch = 0 : i64, scratch_operands = 2 : i64, tpu.core_type = #tpu.core_type<tc>, window_params = [{transform_indices = @transform_0, window_bounds = array<i64: 1, 64, 64>}, {pipeline_mode = #tpu.pipeline_mode<synchronous>, transform_indices = @transform_1, window_bounds = array<i64: 64, 256>}, {pipeline_mode = #tpu.pipeline_mode<synchronous>, transform_indices = @transform_2, window_bounds = array<i64: 1, 256>}, {pipeline_mode = #tpu.pipeline_mode<synchronous>, transform_indices = @transform_3, window_bounds = array<i64: 64, 256>}, {pipeline_mode = #tpu.pipeline_mode<synchronous>, transform_indices = @transform_4, window_bounds = array<i64: 64, 128>}, {pipeline_mode = #tpu.pipeline_mode<synchronous>, transform_indices = @transform_5, window_bounds = array<i64: 1, 128>}, {transform_indices = @transform_6, window_bounds = array<i64: 1, 64, 128>}]} {
    %c0 = arith.constant 0 : index
    %c0_0 = arith.constant 0 : index
    %c0_1 = arith.constant 0 : index
    %0 = vector.load %arg1[%c0, %c0_0, %c0_1] : memref<1x64x64xbf16, #tpu.memory_space<vmem>>, vector<1x64x64xbf16>
    %1 = vector.shape_cast %0 : vector<1x64x64xbf16> to vector<64x64xbf16>
    %c0_2 = arith.constant 0 : index
    %c0_3 = arith.constant 0 : index
    %2 = vector.load %arg2[%c0_2, %c0_3] : memref<64x256xbf16, #tpu.memory_space<vmem>>, vector<64x256xbf16>
    %cst = arith.constant dense<0.000000e+00> : vector<64x256xf32>
    %3 = tpu.matmul %1, %2, %cst {dimension_numbers = #tpu.dot_dimension_numbers<[1], [0], [0], [1], [0, 0, 1, 1], [], []>} : vector<64x64xbf16>, vector<64x256xbf16>, vector<64x256xf32> -> vector<64x256xf32>
    %c0_4 = arith.constant 0 : index
    %c0_5 = arith.constant 0 : index
    %4 = vector.load %arg3[%c0_4, %c0_5] : memref<1x256xf32, #tpu.memory_space<vmem>>, vector<1x256xf32>
    %5 = vector.broadcast %4 : vector<1x256xf32> to vector<64x256xf32>
    %6 = arith.addf %3, %5 : vector<64x256xf32>
    %c0_6 = arith.constant 0 : index
    %c0_7 = arith.constant 0 : index
    %7 = vector.load %arg8[%c0_6, %c0_7] : memref<64x256xf32, #tpu.memory_space<vmem>>, vector<64x256xf32>
    tpu.vector_store %arg8[%c0_6, %c0_7], %6 {strides = array<i32>} : memref<64x256xf32, #tpu.memory_space<vmem>>, vector<64x256xf32>,
    %8 = tpu.iota {dimensions = array<i32: 1>} : vector<8x256xi32>
    %c128_i32 = arith.constant 128 : i32
    %9 = vector.broadcast %c128_i32 : i32 to vector<8x256xi32>
    %10 = arith.cmpi sge, %8, %9 : vector<8x256xi32>
    %c192_i32 = arith.constant 192 : i32
    %11 = vector.broadcast %c192_i32 : i32 to vector<8x256xi32>
    %12 = arith.cmpi slt, %8, %11 : vector<8x256xi32>
    %13 = arith.andi %10, %12 : vector<8x256xi1>
    %c0_8 = arith.constant 0 : index
    %c0_9 = arith.constant 0 : index
    %14 = vector.load %arg4[%c0_8, %c0_9] : memref<64x256xbf16, #tpu.memory_space<vmem>>, vector<64x256xbf16>
    %cst_10 = arith.constant 0.000000e+00 : f32
    %15 = vector.broadcast %cst_10 : f32 to vector<8x64xf32>
    %cst_11 = arith.constant 0.000000e+00 : f32
    %16 = vector.broadcast %cst_11 : f32 to vector<8x64xf32>
    %c0_i32 = arith.constant 0 : i32
    %c8_i32 = arith.constant 8 : i32
    %17 = arith.muli %c0_i32, %c8_i32 : i32
    %18 = tpu.assume_multiple %17, 8 : i32
    %19 = arith.index_cast %18 : i32 to index
    %c0_12 = arith.constant 0 : index
    %20 = vector.load %arg8[%19, %c0_12] : memref<64x256xf32, #tpu.memory_space<vmem>>, vector<8x256xf32>
    %21 = arith.truncf %15 : vector<8x64xf32> to vector<8x64xbf16>
    %cst_13 = arith.constant dense<0.000000e+00> : vector<8x256xf32>
    %22 = tpu.matmul %21, %14, %cst_13 {dimension_numbers = #tpu.dot_dimension_numbers<[1], [0], [0], [1], [0, 0, 1, 1], [], []>} : vector<8x64xbf16>, vector<64x256xbf16>, vector<8x256xf32> -> vector<8x256xf32>
    %23 = arith.addf %22, %20 : vector<8x256xf32>
    %cst_14 = arith.constant 2.000000e+00 : f32
    %24 = vector.broadcast %cst_14 : f32 to vector<8x256xf32>
    %25 = arith.mulf %23, %24 : vector<8x256xf32>
    %26 = arith.select %13, %25, %23 : vector<8x256xi1>, vector<8x256xf32>
    %27 = arith.negf %26 : vector<8x256xf32>
    %28 = math.exp %27 : vector<8x256xf32>
    %cst_15 = arith.constant 1.000000e+00 : f32
    %29 = vector.broadcast %cst_15 : f32 to vector<8x256xf32>
    %30 = arith.addf %29, %28 : vector<8x256xf32>
    %31 = arith.divf %29, %30 : vector<8x256xf32>
    %cst_16 = arith.constant 2.000000e+00 : f32
    %32 = vector.broadcast %cst_16 : f32 to vector<8x256xf32>
    %33 = arith.mulf %31, %32 : vector<8x256xf32>
    %cst_17 = arith.constant 1.000000e+00 : f32
    %34 = vector.broadcast %cst_17 : f32 to vector<8x256xf32>
    %35 = arith.subf %33, %34 : vector<8x256xf32>
    %36 = arith.select %13, %35, %31 : vector<8x256xi1>, vector<8x256xf32>
    %37 = vector.extract_strided_slice %36 {offsets = [0, 0], sizes = [8, 64], strides = [1, 1]} : vector<8x256xf32> to vector<8x64xf32>
    %38 = vector.extract_strided_slice %36 {offsets = [0, 64], sizes = [8, 64], strides = [1, 1]} : vector<8x256xf32> to vector<8x64xf32>
    %39 = vector.extract_strided_slice %36 {offsets = [0, 128], sizes = [8, 64], strides = [1, 1]} : vector<8x256xf32> to vector<8x64xf32>
    %40 = vector.extract_strided_slice %36 {offsets = [0, 192], sizes = [8, 64], strides = [1, 1]} : vector<8x256xf32> to vector<8x64xf32>
    %41 = arith.mulf %38, %16 : vector<8x64xf32>
    %42 = arith.mulf %37, %39 : vector<8x64xf32>
    %43 = arith.addf %41, %42 : vector<8x64xf32>
    %44 = math.tanh %43 : vector<8x64xf32>
    %45 = arith.mulf %40, %44 : vector<8x64xf32>
    %c7_i32 = arith.constant 7 : i32
    %46 = arith.subi %c7_i32, %c0_i32 : i32
    %c8_i32_18 = arith.constant 8 : i32
    %47 = arith.muli %46, %c8_i32_18 : i32
    %48 = tpu.assume_multiple %47, 8 : i32
    %49 = vector.extract_strided_slice %45 {offsets = [0, 0], sizes = [8, 32], strides = [1, 1]} : vector<8x64xf32> to vector<8x32xf32>
    %50 = arith.index_cast %18 : i32 to index
    %c0_19 = arith.constant 0 : index
    %51 = vector.load %arg9[%50, %c0_19] : memref<64x64xf32, #tpu.memory_space<vmem>>, vector<8x32xf32>
    tpu.vector_store %arg9[%50, %c0_19], %49 {strides = array<i32>} : memref<64x64xf32, #tpu.memory_space<vmem>>, vector<8x32xf32>,
    %52 = vector.extract_strided_slice %45 {offsets = [0, 32], sizes = [8, 32], strides = [1, 1]} : vector<8x64xf32> to vector<8x32xf32>
    %53 = arith.index_cast %48 : i32 to index
    %c32 = arith.constant 32 : index
    %54 = vector.load %arg9[%53, %c32] : memref<64x64xf32, #tpu.memory_space<vmem>>, vector<8x32xf32>
    tpu.vector_store %arg9[%53, %c32], %52 {strides = array<i32>} : memref<64x64xf32, #tpu.memory_space<vmem>>, vector<8x32xf32>,
    %c1_i32 = arith.constant 1 : i32
    %c8_i32_20 = arith.constant 8 : i32
    %55 = arith.muli %c1_i32, %c8_i32_20 : i32
    %56 = tpu.assume_multiple %55, 8 : i32
    %57 = arith.index_cast %56 : i32 to index
    %c0_21 = arith.constant 0 : index
    %58 = vector.load %arg8[%57, %c0_21] : memref<64x256xf32, #tpu.memory_space<vmem>>, vector<8x256xf32>
    %59 = arith.truncf %45 : vector<8x64xf32> to vector<8x64xbf16>
    %cst_22 = arith.constant dense<0.000000e+00> : vector<8x256xf32>
    %60 = tpu.matmul %59, %14, %cst_22 {dimension_numbers = #tpu.dot_dimension_numbers<[1], [0], [0], [1], [0, 0, 1, 1], [], []>} : vector<8x64xbf16>, vector<64x256xbf16>, vector<8x256xf32> -> vector<8x256xf32>
    %61 = arith.addf %60, %58 : vector<8x256xf32>
    %cst_23 = arith.constant 2.000000e+00 : f32
    %62 = vector.broadcast %cst_23 : f32 to vector<8x256xf32>
    %63 = arith.mulf %61, %62 : vector<8x256xf32>
    %64 = arith.select %13, %63, %61 : vector<8x256xi1>, vector<8x256xf32>
    %65 = arith.negf %64 : vector<8x256xf32>
    %66 = math.exp %65 : vector<8x256xf32>
    %cst_24 = arith.constant 1.000000e+00 : f32
    %67 = vector.broadcast %cst_24 : f32 to vector<8x256xf32>
    %68 = arith.addf %67, %66 : vector<8x256xf32>
    %69 = arith.divf %67, %68 : vector<8x256xf32>
    %cst_25 = arith.constant 2.000000e+00 : f32
    %70 = vector.broadcast %cst_25 : f32 to vector<8x256xf32>
    %71 = arith.mulf %69, %70 : vector<8x256xf32>
    %cst_26 = arith.constant 1.000000e+00 : f32
    %72 = vector.broadcast %cst_26 : f32 to vector<8x256xf32>
    %73 = arith.subf %71, %72 : vector<8x256xf32>
    %74 = arith.select %13, %73, %69 : vector<8x256xi1>, vector<8x256xf32>
    %75 = vector.extract_strided_slice %74 {offsets = [0, 0], sizes = [8, 64], strides = [1, 1]} : vector<8x256xf32> to vector<8x64xf32>
    %76 = vector.extract_strided_slice %74 {offsets = [0, 64], sizes = [8, 64], strides = [1, 1]} : vector<8x256xf32> to vector<8x64xf32>
    %77 = vector.extract_strided_slice %74 {offsets = [0, 128], sizes = [8, 64], strides = [1, 1]} : vector<8x256xf32> to vector<8x64xf32>
    %78 = vector.extract_strided_slice %74 {offsets = [0, 192], sizes = [8, 64], strides = [1, 1]} : vector<8x256xf32> to vector<8x64xf32>
    %79 = arith.mulf %76, %43 : vector<8x64xf32>
    %80 = arith.mulf %75, %77 : vector<8x64xf32>
    %81 = arith.addf %79, %80 : vector<8x64xf32>
    %82 = math.tanh %81 : vector<8x64xf32>
    %83 = arith.mulf %78, %82 : vector<8x64xf32>
    %c7_i32_27 = arith.constant 7 : i32
    %84 = arith.subi %c7_i32_27, %c1_i32 : i32
    %c8_i32_28 = arith.constant 8 : i32
    %85 = arith.muli %84, %c8_i32_28 : i32
    %86 = tpu.assume_multiple %85, 8 : i32
    %87 = vector.extract_strided_slice %83 {offsets = [0, 0], sizes = [8, 32], strides = [1, 1]} : vector<8x64xf32> to vector<8x32xf32>
    %88 = arith.index_cast %56 : i32 to index
    %c0_29 = arith.constant 0 : index
    %89 = vector.load %arg9[%88, %c0_29] : memref<64x64xf32, #tpu.memory_space<vmem>>, vector<8x32xf32>
    tpu.vector_store %arg9[%88, %c0_29], %87 {strides = array<i32>} : memref<64x64xf32, #tpu.memory_space<vmem>>, vector<8x32xf32>,
    %90 = vector.extract_strided_slice %83 {offsets = [0, 32], sizes = [8, 32], strides = [1, 1]} : vector<8x64xf32> to vector<8x32xf32>
    %91 = arith.index_cast %86 : i32 to index
    %c32_30 = arith.constant 32 : index
    %92 = vector.load %arg9[%91, %c32_30] : memref<64x64xf32, #tpu.memory_space<vmem>>, vector<8x32xf32>
    tpu.vector_store %arg9[%91, %c32_30], %90 {strides = array<i32>} : memref<64x64xf32, #tpu.memory_space<vmem>>, vector<8x32xf32>,
    %c2_i32 = arith.constant 2 : i32
    %c8_i32_31 = arith.constant 8 : i32
    %93 = arith.muli %c2_i32, %c8_i32_31 : i32
    %94 = tpu.assume_multiple %93, 8 : i32
    %95 = arith.index_cast %94 : i32 to index
    %c0_32 = arith.constant 0 : index
    %96 = vector.load %arg8[%95, %c0_32] : memref<64x256xf32, #tpu.memory_space<vmem>>, vector<8x256xf32>
    %97 = arith.truncf %83 : vector<8x64xf32> to vector<8x64xbf16>
    %cst_33 = arith.constant dense<0.000000e+00> : vector<8x256xf32>
    %98 = tpu.matmul %97, %14, %cst_33 {dimension_numbers = #tpu.dot_dimension_numbers<[1], [0], [0], [1], [0, 0, 1, 1], [], []>} : vector<8x64xbf16>, vector<64x256xbf16>, vector<8x256xf32> -> vector<8x256xf32>
    %99 = arith.addf %98, %96 : vector<8x256xf32>
    %cst_34 = arith.constant 2.000000e+00 : f32
    %100 = vector.broadcast %cst_34 : f32 to vector<8x256xf32>
    %101 = arith.mulf %99, %100 : vector<8x256xf32>
    %102 = arith.select %13, %101, %99 : vector<8x256xi1>, vector<8x256xf32>
    %103 = arith.negf %102 : vector<8x256xf32>
    %104 = math.exp %103 : vector<8x256xf32>
    %cst_35 = arith.constant 1.000000e+00 : f32
    %105 = vector.broadcast %cst_35 : f32 to vector<8x256xf32>
    %106 = arith.addf %105, %104 : vector<8x256xf32>
    %107 = arith.divf %105, %106 : vector<8x256xf32>
    %cst_36 = arith.constant 2.000000e+00 : f32
    %108 = vector.broadcast %cst_36 : f32 to vector<8x256xf32>
    %109 = arith.mulf %107, %108 : vector<8x256xf32>
    %cst_37 = arith.constant 1.000000e+00 : f32
    %110 = vector.broadcast %cst_37 : f32 to vector<8x256xf32>
    %111 = arith.subf %109, %110 : vector<8x256xf32>
    %112 = arith.select %13, %111, %107 : vector<8x256xi1>, vector<8x256xf32>
    %113 = vector.extract_strided_slice %112 {offsets = [0, 0], sizes = [8, 64], strides = [1, 1]} : vector<8x256xf32> to vector<8x64xf32>
    %114 = vector.extract_strided_slice %112 {offsets = [0, 64], sizes = [8, 64], strides = [1, 1]} : vector<8x256xf32> to vector<8x64xf32>
    %115 = vector.extract_strided_slice %112 {offsets = [0, 128], sizes = [8, 64], strides = [1, 1]} : vector<8x256xf32> to vector<8x64xf32>
    %116 = vector.extract_strided_slice %112 {offsets = [0, 192], sizes = [8, 64], strides = [1, 1]} : vector<8x256xf32> to vector<8x64xf32>
    %117 = arith.mulf %114, %81 : vector<8x64xf32>
    %118 = arith.mulf %113, %115 : vector<8x64xf32>
    %119 = arith.addf %117, %118 : vector<8x64xf32>
    %120 = math.tanh %119 : vector<8x64xf32>
    %121 = arith.mulf %116, %120 : vector<8x64xf32>
    %c7_i32_38 = arith.constant 7 : i32
    %122 = arith.subi %c7_i32_38, %c2_i32 : i32
    %c8_i32_39 = arith.constant 8 : i32
    %123 = arith.muli %122, %c8_i32_39 : i32
    %124 = tpu.assume_multiple %123, 8 : i32
    %125 = vector.extract_strided_slice %121 {offsets = [0, 0], sizes = [8, 32], strides = [1, 1]} : vector<8x64xf32> to vector<8x32xf32>
    %126 = arith.index_cast %94 : i32 to index
    %c0_40 = arith.constant 0 : index
    %127 = vector.load %arg9[%126, %c0_40] : memref<64x64xf32, #tpu.memory_space<vmem>>, vector<8x32xf32>
    tpu.vector_store %arg9[%126, %c0_40], %125 {strides = array<i32>} : memref<64x64xf32, #tpu.memory_space<vmem>>, vector<8x32xf32>,
    %128 = vector.extract_strided_slice %121 {offsets = [0, 32], sizes = [8, 32], strides = [1, 1]} : vector<8x64xf32> to vector<8x32xf32>
    %129 = arith.index_cast %124 : i32 to index
    %c32_41 = arith.constant 32 : index
    %130 = vector.load %arg9[%129, %c32_41] : memref<64x64xf32, #tpu.memory_space<vmem>>, vector<8x32xf32>
    tpu.vector_store %arg9[%129, %c32_41], %128 {strides = array<i32>} : memref<64x64xf32, #tpu.memory_space<vmem>>, vector<8x32xf32>,
    %c3_i32 = arith.constant 3 : i32
    %c8_i32_42 = arith.constant 8 : i32
    %131 = arith.muli %c3_i32, %c8_i32_42 : i32
    %132 = tpu.assume_multiple %131, 8 : i32
    %133 = arith.index_cast %132 : i32 to index
    %c0_43 = arith.constant 0 : index
    %134 = vector.load %arg8[%133, %c0_43] : memref<64x256xf32, #tpu.memory_space<vmem>>, vector<8x256xf32>
    %135 = arith.truncf %121 : vector<8x64xf32> to vector<8x64xbf16>
    %cst_44 = arith.constant dense<0.000000e+00> : vector<8x256xf32>
    %136 = tpu.matmul %135, %14, %cst_44 {dimension_numbers = #tpu.dot_dimension_numbers<[1], [0], [0], [1], [0, 0, 1, 1], [], []>} : vector<8x64xbf16>, vector<64x256xbf16>, vector<8x256xf32> -> vector<8x256xf32>
    %137 = arith.addf %136, %134 : vector<8x256xf32>
    %cst_45 = arith.constant 2.000000e+00 : f32
    %138 = vector.broadcast %cst_45 : f32 to vector<8x256xf32>
    %139 = arith.mulf %137, %138 : vector<8x256xf32>
    %140 = arith.select %13, %139, %137 : vector<8x256xi1>, vector<8x256xf32>
    %141 = arith.negf %140 : vector<8x256xf32>
    %142 = math.exp %141 : vector<8x256xf32>
    %cst_46 = arith.constant 1.000000e+00 : f32
    %143 = vector.broadcast %cst_46 : f32 to vector<8x256xf32>
    %144 = arith.addf %143, %142 : vector<8x256xf32>
    %145 = arith.divf %143, %144 : vector<8x256xf32>
    %cst_47 = arith.constant 2.000000e+00 : f32
    %146 = vector.broadcast %cst_47 : f32 to vector<8x256xf32>
    %147 = arith.mulf %145, %146 : vector<8x256xf32>
    %cst_48 = arith.constant 1.000000e+00 : f32
    %148 = vector.broadcast %cst_48 : f32 to vector<8x256xf32>
    %149 = arith.subf %147, %148 : vector<8x256xf32>
    %150 = arith.select %13, %149, %145 : vector<8x256xi1>, vector<8x256xf32>
    %151 = vector.extract_strided_slice %150 {offsets = [0, 0], sizes = [8, 64], strides = [1, 1]} : vector<8x256xf32> to vector<8x64xf32>
    %152 = vector.extract_strided_slice %150 {offsets = [0, 64], sizes = [8, 64], strides = [1, 1]} : vector<8x256xf32> to vector<8x64xf32>
    %153 = vector.extract_strided_slice %150 {offsets = [0, 128], sizes = [8, 64], strides = [1, 1]} : vector<8x256xf32> to vector<8x64xf32>
    %154 = vector.extract_strided_slice %150 {offsets = [0, 192], sizes = [8, 64], strides = [1, 1]} : vector<8x256xf32> to vector<8x64xf32>
    %155 = arith.mulf %152, %119 : vector<8x64xf32>
    %156 = arith.mulf %151, %153 : vector<8x64xf32>
    %157 = arith.addf %155, %156 : vector<8x64xf32>
    %158 = math.tanh %157 : vector<8x64xf32>
    %159 = arith.mulf %154, %158 : vector<8x64xf32>
    %c7_i32_49 = arith.constant 7 : i32
    %160 = arith.subi %c7_i32_49, %c3_i32 : i32
    %c8_i32_50 = arith.constant 8 : i32
    %161 = arith.muli %160, %c8_i32_50 : i32
    %162 = tpu.assume_multiple %161, 8 : i32
    %163 = vector.extract_strided_slice %159 {offsets = [0, 0], sizes = [8, 32], strides = [1, 1]} : vector<8x64xf32> to vector<8x32xf32>
    %164 = arith.index_cast %132 : i32 to index
    %c0_51 = arith.constant 0 : index
    %165 = vector.load %arg9[%164, %c0_51] : memref<64x64xf32, #tpu.memory_space<vmem>>, vector<8x32xf32>
    tpu.vector_store %arg9[%164, %c0_51], %163 {strides = array<i32>} : memref<64x64xf32, #tpu.memory_space<vmem>>, vector<8x32xf32>,
    %166 = vector.extract_strided_slice %159 {offsets = [0, 32], sizes = [8, 32], strides = [1, 1]} : vector<8x64xf32> to vector<8x32xf32>
    %167 = arith.index_cast %162 : i32 to index
    %c32_52 = arith.constant 32 : index
    %168 = vector.load %arg9[%167, %c32_52] : memref<64x64xf32, #tpu.memory_space<vmem>>, vector<8x32xf32>
    tpu.vector_store %arg9[%167, %c32_52], %166 {strides = array<i32>} : memref<64x64xf32, #tpu.memory_space<vmem>>, vector<8x32xf32>,
    %c4_i32 = arith.constant 4 : i32
    %c8_i32_53 = arith.constant 8 : i32
    %169 = arith.muli %c4_i32, %c8_i32_53 : i32
    %170 = tpu.assume_multiple %169, 8 : i32
    %171 = arith.index_cast %170 : i32 to index
    %c0_54 = arith.constant 0 : index
    %172 = vector.load %arg8[%171, %c0_54] : memref<64x256xf32, #tpu.memory_space<vmem>>, vector<8x256xf32>
    %173 = arith.truncf %159 : vector<8x64xf32> to vector<8x64xbf16>
    %cst_55 = arith.constant dense<0.000000e+00> : vector<8x256xf32>
    %174 = tpu.matmul %173, %14, %cst_55 {dimension_numbers = #tpu.dot_dimension_numbers<[1], [0], [0], [1], [0, 0, 1, 1], [], []>} : vector<8x64xbf16>, vector<64x256xbf16>, vector<8x256xf32> -> vector<8x256xf32>
    %175 = arith.addf %174, %172 : vector<8x256xf32>
    %cst_56 = arith.constant 2.000000e+00 : f32
    %176 = vector.broadcast %cst_56 : f32 to vector<8x256xf32>
    %177 = arith.mulf %175, %176 : vector<8x256xf32>
    %178 = arith.select %13, %177, %175 : vector<8x256xi1>, vector<8x256xf32>
    %179 = arith.negf %178 : vector<8x256xf32>
    %180 = math.exp %179 : vector<8x256xf32>
    %cst_57 = arith.constant 1.000000e+00 : f32
    %181 = vector.broadcast %cst_57 : f32 to vector<8x256xf32>
    %182 = arith.addf %181, %180 : vector<8x256xf32>
    %183 = arith.divf %181, %182 : vector<8x256xf32>
    %cst_58 = arith.constant 2.000000e+00 : f32
    %184 = vector.broadcast %cst_58 : f32 to vector<8x256xf32>
    %185 = arith.mulf %183, %184 : vector<8x256xf32>
    %cst_59 = arith.constant 1.000000e+00 : f32
    %186 = vector.broadcast %cst_59 : f32 to vector<8x256xf32>
    %187 = arith.subf %185, %186 : vector<8x256xf32>
    %188 = arith.select %13, %187, %183 : vector<8x256xi1>, vector<8x256xf32>
    %189 = vector.extract_strided_slice %188 {offsets = [0, 0], sizes = [8, 64], strides = [1, 1]} : vector<8x256xf32> to vector<8x64xf32>
    %190 = vector.extract_strided_slice %188 {offsets = [0, 64], sizes = [8, 64], strides = [1, 1]} : vector<8x256xf32> to vector<8x64xf32>
    %191 = vector.extract_strided_slice %188 {offsets = [0, 128], sizes = [8, 64], strides = [1, 1]} : vector<8x256xf32> to vector<8x64xf32>
    %192 = vector.extract_strided_slice %188 {offsets = [0, 192], sizes = [8, 64], strides = [1, 1]} : vector<8x256xf32> to vector<8x64xf32>
    %193 = arith.mulf %190, %157 : vector<8x64xf32>
    %194 = arith.mulf %189, %191 : vector<8x64xf32>
    %195 = arith.addf %193, %194 : vector<8x64xf32>
    %196 = math.tanh %195 : vector<8x64xf32>
    %197 = arith.mulf %192, %196 : vector<8x64xf32>
    %c7_i32_60 = arith.constant 7 : i32
    %198 = arith.subi %c7_i32_60, %c4_i32 : i32
    %c8_i32_61 = arith.constant 8 : i32
    %199 = arith.muli %198, %c8_i32_61 : i32
    %200 = tpu.assume_multiple %199, 8 : i32
    %201 = vector.extract_strided_slice %197 {offsets = [0, 0], sizes = [8, 32], strides = [1, 1]} : vector<8x64xf32> to vector<8x32xf32>
    %202 = arith.index_cast %170 : i32 to index
    %c0_62 = arith.constant 0 : index
    %203 = vector.load %arg9[%202, %c0_62] : memref<64x64xf32, #tpu.memory_space<vmem>>, vector<8x32xf32>
    tpu.vector_store %arg9[%202, %c0_62], %201 {strides = array<i32>} : memref<64x64xf32, #tpu.memory_space<vmem>>, vector<8x32xf32>,
    %204 = vector.extract_strided_slice %197 {offsets = [0, 32], sizes = [8, 32], strides = [1, 1]} : vector<8x64xf32> to vector<8x32xf32>
    %205 = arith.index_cast %200 : i32 to index
    %c32_63 = arith.constant 32 : index
    %206 = vector.load %arg9[%205, %c32_63] : memref<64x64xf32, #tpu.memory_space<vmem>>, vector<8x32xf32>
    tpu.vector_store %arg9[%205, %c32_63], %204 {strides = array<i32>} : memref<64x64xf32, #tpu.memory_space<vmem>>, vector<8x32xf32>,
    %c5_i32 = arith.constant 5 : i32
    %c8_i32_64 = arith.constant 8 : i32
    %207 = arith.muli %c5_i32, %c8_i32_64 : i32
    %208 = tpu.assume_multiple %207, 8 : i32
    %209 = arith.index_cast %208 : i32 to index
    %c0_65 = arith.constant 0 : index
    %210 = vector.load %arg8[%209, %c0_65] : memref<64x256xf32, #tpu.memory_space<vmem>>, vector<8x256xf32>
    %211 = arith.truncf %197 : vector<8x64xf32> to vector<8x64xbf16>
    %cst_66 = arith.constant dense<0.000000e+00> : vector<8x256xf32>
    %212 = tpu.matmul %211, %14, %cst_66 {dimension_numbers = #tpu.dot_dimension_numbers<[1], [0], [0], [1], [0, 0, 1, 1], [], []>} : vector<8x64xbf16>, vector<64x256xbf16>, vector<8x256xf32> -> vector<8x256xf32>
    %213 = arith.addf %212, %210 : vector<8x256xf32>
    %cst_67 = arith.constant 2.000000e+00 : f32
    %214 = vector.broadcast %cst_67 : f32 to vector<8x256xf32>
    %215 = arith.mulf %213, %214 : vector<8x256xf32>
    %216 = arith.select %13, %215, %213 : vector<8x256xi1>, vector<8x256xf32>
    %217 = arith.negf %216 : vector<8x256xf32>
    %218 = math.exp %217 : vector<8x256xf32>
    %cst_68 = arith.constant 1.000000e+00 : f32
    %219 = vector.broadcast %cst_68 : f32 to vector<8x256xf32>
    %220 = arith.addf %219, %218 : vector<8x256xf32>
    %221 = arith.divf %219, %220 : vector<8x256xf32>
    %cst_69 = arith.constant 2.000000e+00 : f32
    %222 = vector.broadcast %cst_69 : f32 to vector<8x256xf32>
    %223 = arith.mulf %221, %222 : vector<8x256xf32>
    %cst_70 = arith.constant 1.000000e+00 : f32
    %224 = vector.broadcast %cst_70 : f32 to vector<8x256xf32>
    %225 = arith.subf %223, %224 : vector<8x256xf32>
    %226 = arith.select %13, %225, %221 : vector<8x256xi1>, vector<8x256xf32>
    %227 = vector.extract_strided_slice %226 {offsets = [0, 0], sizes = [8, 64], strides = [1, 1]} : vector<8x256xf32> to vector<8x64xf32>
    %228 = vector.extract_strided_slice %226 {offsets = [0, 64], sizes = [8, 64], strides = [1, 1]} : vector<8x256xf32> to vector<8x64xf32>
    %229 = vector.extract_strided_slice %226 {offsets = [0, 128], sizes = [8, 64], strides = [1, 1]} : vector<8x256xf32> to vector<8x64xf32>
    %230 = vector.extract_strided_slice %226 {offsets = [0, 192], sizes = [8, 64], strides = [1, 1]} : vector<8x256xf32> to vector<8x64xf32>
    %231 = arith.mulf %228, %195 : vector<8x64xf32>
    %232 = arith.mulf %227, %229 : vector<8x64xf32>
    %233 = arith.addf %231, %232 : vector<8x64xf32>
    %234 = math.tanh %233 : vector<8x64xf32>
    %235 = arith.mulf %230, %234 : vector<8x64xf32>
    %c7_i32_71 = arith.constant 7 : i32
    %236 = arith.subi %c7_i32_71, %c5_i32 : i32
    %c8_i32_72 = arith.constant 8 : i32
    %237 = arith.muli %236, %c8_i32_72 : i32
    %238 = tpu.assume_multiple %237, 8 : i32
    %239 = vector.extract_strided_slice %235 {offsets = [0, 0], sizes = [8, 32], strides = [1, 1]} : vector<8x64xf32> to vector<8x32xf32>
    %240 = arith.index_cast %208 : i32 to index
    %c0_73 = arith.constant 0 : index
    %241 = vector.load %arg9[%240, %c0_73] : memref<64x64xf32, #tpu.memory_space<vmem>>, vector<8x32xf32>
    tpu.vector_store %arg9[%240, %c0_73], %239 {strides = array<i32>} : memref<64x64xf32, #tpu.memory_space<vmem>>, vector<8x32xf32>,
    %242 = vector.extract_strided_slice %235 {offsets = [0, 32], sizes = [8, 32], strides = [1, 1]} : vector<8x64xf32> to vector<8x32xf32>
    %243 = arith.index_cast %238 : i32 to index
    %c32_74 = arith.constant 32 : index
    %244 = vector.load %arg9[%243, %c32_74] : memref<64x64xf32, #tpu.memory_space<vmem>>, vector<8x32xf32>
    tpu.vector_store %arg9[%243, %c32_74], %242 {strides = array<i32>} : memref<64x64xf32, #tpu.memory_space<vmem>>, vector<8x32xf32>,
    %c6_i32 = arith.constant 6 : i32
    %c8_i32_75 = arith.constant 8 : i32
    %245 = arith.muli %c6_i32, %c8_i32_75 : i32
    %246 = tpu.assume_multiple %245, 8 : i32
    %247 = arith.index_cast %246 : i32 to index
    %c0_76 = arith.constant 0 : index
    %248 = vector.load %arg8[%247, %c0_76] : memref<64x256xf32, #tpu.memory_space<vmem>>, vector<8x256xf32>
    %249 = arith.truncf %235 : vector<8x64xf32> to vector<8x64xbf16>
    %cst_77 = arith.constant dense<0.000000e+00> : vector<8x256xf32>
    %250 = tpu.matmul %249, %14, %cst_77 {dimension_numbers = #tpu.dot_dimension_numbers<[1], [0], [0], [1], [0, 0, 1, 1], [], []>} : vector<8x64xbf16>, vector<64x256xbf16>, vector<8x256xf32> -> vector<8x256xf32>
    %251 = arith.addf %250, %248 : vector<8x256xf32>
    %cst_78 = arith.constant 2.000000e+00 : f32
    %252 = vector.broadcast %cst_78 : f32 to vector<8x256xf32>
    %253 = arith.mulf %251, %252 : vector<8x256xf32>
    %254 = arith.select %13, %253, %251 : vector<8x256xi1>, vector<8x256xf32>
    %255 = arith.negf %254 : vector<8x256xf32>
    %256 = math.exp %255 : vector<8x256xf32>
    %cst_79 = arith.constant 1.000000e+00 : f32
    %257 = vector.broadcast %cst_79 : f32 to vector<8x256xf32>
    %258 = arith.addf %257, %256 : vector<8x256xf32>
    %259 = arith.divf %257, %258 : vector<8x256xf32>
    %cst_80 = arith.constant 2.000000e+00 : f32
    %260 = vector.broadcast %cst_80 : f32 to vector<8x256xf32>
    %261 = arith.mulf %259, %260 : vector<8x256xf32>
    %cst_81 = arith.constant 1.000000e+00 : f32
    %262 = vector.broadcast %cst_81 : f32 to vector<8x256xf32>
    %263 = arith.subf %261, %262 : vector<8x256xf32>
    %264 = arith.select %13, %263, %259 : vector<8x256xi1>, vector<8x256xf32>
    %265 = vector.extract_strided_slice %264 {offsets = [0, 0], sizes = [8, 64], strides = [1, 1]} : vector<8x256xf32> to vector<8x64xf32>
    %266 = vector.extract_strided_slice %264 {offsets = [0, 64], sizes = [8, 64], strides = [1, 1]} : vector<8x256xf32> to vector<8x64xf32>
    %267 = vector.extract_strided_slice %264 {offsets = [0, 128], sizes = [8, 64], strides = [1, 1]} : vector<8x256xf32> to vector<8x64xf32>
    %268 = vector.extract_strided_slice %264 {offsets = [0, 192], sizes = [8, 64], strides = [1, 1]} : vector<8x256xf32> to vector<8x64xf32>
    %269 = arith.mulf %266, %233 : vector<8x64xf32>
    %270 = arith.mulf %265, %267 : vector<8x64xf32>
    %271 = arith.addf %269, %270 : vector<8x64xf32>
    %272 = math.tanh %271 : vector<8x64xf32>
    %273 = arith.mulf %268, %272 : vector<8x64xf32>
    %c7_i32_82 = arith.constant 7 : i32
    %274 = arith.subi %c7_i32_82, %c6_i32 : i32
    %c8_i32_83 = arith.constant 8 : i32
    %275 = arith.muli %274, %c8_i32_83 : i32
    %276 = tpu.assume_multiple %275, 8 : i32
    %277 = vector.extract_strided_slice %273 {offsets = [0, 0], sizes = [8, 32], strides = [1, 1]} : vector<8x64xf32> to vector<8x32xf32>
    %278 = arith.index_cast %246 : i32 to index
    %c0_84 = arith.constant 0 : index
    %279 = vector.load %arg9[%278, %c0_84] : memref<64x64xf32, #tpu.memory_space<vmem>>, vector<8x32xf32>
    tpu.vector_store %arg9[%278, %c0_84], %277 {strides = array<i32>} : memref<64x64xf32, #tpu.memory_space<vmem>>, vector<8x32xf32>,
    %280 = vector.extract_strided_slice %273 {offsets = [0, 32], sizes = [8, 32], strides = [1, 1]} : vector<8x64xf32> to vector<8x32xf32>
    %281 = arith.index_cast %276 : i32 to index
    %c32_85 = arith.constant 32 : index
    %282 = vector.load %arg9[%281, %c32_85] : memref<64x64xf32, #tpu.memory_space<vmem>>, vector<8x32xf32>
    tpu.vector_store %arg9[%281, %c32_85], %280 {strides = array<i32>} : memref<64x64xf32, #tpu.memory_space<vmem>>, vector<8x32xf32>,
    %c7_i32_86 = arith.constant 7 : i32
    %c8_i32_87 = arith.constant 8 : i32
    %283 = arith.muli %c7_i32_86, %c8_i32_87 : i32
    %284 = tpu.assume_multiple %283, 8 : i32
    %285 = arith.index_cast %284 : i32 to index
    %c0_88 = arith.constant 0 : index
    %286 = vector.load %arg8[%285, %c0_88] : memref<64x256xf32, #tpu.memory_space<vmem>>, vector<8x256xf32>
    %287 = arith.truncf %273 : vector<8x64xf32> to vector<8x64xbf16>
    %cst_89 = arith.constant dense<0.000000e+00> : vector<8x256xf32>
    %288 = tpu.matmul %287, %14, %cst_89 {dimension_numbers = #tpu.dot_dimension_numbers<[1], [0], [0], [1], [0, 0, 1, 1], [], []>} : vector<8x64xbf16>, vector<64x256xbf16>, vector<8x256xf32> -> vector<8x256xf32>
    %289 = arith.addf %288, %286 : vector<8x256xf32>
    %cst_90 = arith.constant 2.000000e+00 : f32
    %290 = vector.broadcast %cst_90 : f32 to vector<8x256xf32>
    %291 = arith.mulf %289, %290 : vector<8x256xf32>
    %292 = arith.select %13, %291, %289 : vector<8x256xi1>, vector<8x256xf32>
    %293 = arith.negf %292 : vector<8x256xf32>
    %294 = math.exp %293 : vector<8x256xf32>
    %cst_91 = arith.constant 1.000000e+00 : f32
    %295 = vector.broadcast %cst_91 : f32 to vector<8x256xf32>
    %296 = arith.addf %295, %294 : vector<8x256xf32>
    %297 = arith.divf %295, %296 : vector<8x256xf32>
    %cst_92 = arith.constant 2.000000e+00 : f32
    %298 = vector.broadcast %cst_92 : f32 to vector<8x256xf32>
    %299 = arith.mulf %297, %298 : vector<8x256xf32>
    %cst_93 = arith.constant 1.000000e+00 : f32
    %300 = vector.broadcast %cst_93 : f32 to vector<8x256xf32>
    %301 = arith.subf %299, %300 : vector<8x256xf32>
    %302 = arith.select %13, %301, %297 : vector<8x256xi1>, vector<8x256xf32>
    %303 = vector.extract_strided_slice %302 {offsets = [0, 0], sizes = [8, 64], strides = [1, 1]} : vector<8x256xf32> to vector<8x64xf32>
    %304 = vector.extract_strided_slice %302 {offsets = [0, 64], sizes = [8, 64], strides = [1, 1]} : vector<8x256xf32> to vector<8x64xf32>
    %305 = vector.extract_strided_slice %302 {offsets = [0, 128], sizes = [8, 64], strides = [1, 1]} : vector<8x256xf32> to vector<8x64xf32>
    %306 = vector.extract_strided_slice %302 {offsets = [0, 192], sizes = [8, 64], strides = [1, 1]} : vector<8x256xf32> to vector<8x64xf32>
    %307 = arith.mulf %304, %271 : vector<8x64xf32>
    %308 = arith.mulf %303, %305 : vector<8x64xf32>
    %309 = arith.addf %307, %308 : vector<8x64xf32>
    %310 = math.tanh %309 : vector<8x64xf32>
    %311 = arith.mulf %306, %310 : vector<8x64xf32>
    %c7_i32_94 = arith.constant 7 : i32
    %312 = arith.subi %c7_i32_94, %c7_i32_86 : i32
    %c8_i32_95 = arith.constant 8 : i32
    %313 = arith.muli %312, %c8_i32_95 : i32
    %314 = tpu.assume_multiple %313, 8 : i32
    %315 = vector.extract_strided_slice %311 {offsets = [0, 0], sizes = [8, 32], strides = [1, 1]} : vector<8x64xf32> to vector<8x32xf32>
    %316 = arith.index_cast %284 : i32 to index
    %c0_96 = arith.constant 0 : index
    %317 = vector.load %arg9[%316, %c0_96] : memref<64x64xf32, #tpu.memory_space<vmem>>, vector<8x32xf32>
    tpu.vector_store %arg9[%316, %c0_96], %315 {strides = array<i32>} : memref<64x64xf32, #tpu.memory_space<vmem>>, vector<8x32xf32>,
    %318 = vector.extract_strided_slice %311 {offsets = [0, 32], sizes = [8, 32], strides = [1, 1]} : vector<8x64xf32> to vector<8x32xf32>
    %319 = arith.index_cast %314 : i32 to index
    %c32_97 = arith.constant 32 : index
    %320 = vector.load %arg9[%319, %c32_97] : memref<64x64xf32, #tpu.memory_space<vmem>>, vector<8x32xf32>
    tpu.vector_store %arg9[%319, %c32_97], %318 {strides = array<i32>} : memref<64x64xf32, #tpu.memory_space<vmem>>, vector<8x32xf32>,
    %c8_i32_98 = arith.constant 8 : i32
    %c0_99 = arith.constant 0 : index
    %c0_100 = arith.constant 0 : index
    %321 = vector.load %arg9[%c0_99, %c0_100] : memref<64x64xf32, #tpu.memory_space<vmem>>, vector<64x64xf32>
    %322 = arith.truncf %321 : vector<64x64xf32> to vector<64x64xbf16>
    %c0_101 = arith.constant 0 : index
    %c0_102 = arith.constant 0 : index
    %323 = vector.load %arg5[%c0_101, %c0_102] : memref<64x128xbf16, #tpu.memory_space<vmem>>, vector<64x128xbf16>
    %cst_103 = arith.constant dense<0.000000e+00> : vector<64x128xf32>
    %324 = tpu.matmul %322, %323, %cst_103 {dimension_numbers = #tpu.dot_dimension_numbers<[1], [0], [0], [1], [0, 0, 1, 1], [], []>} : vector<64x64xbf16>, vector<64x128xbf16>, vector<64x128xf32> -> vector<64x128xf32>
    %c0_104 = arith.constant 0 : index
    %c0_105 = arith.constant 0 : index
    %325 = vector.load %arg6[%c0_104, %c0_105] : memref<1x128xf32, #tpu.memory_space<vmem>>, vector<1x128xf32>
    %326 = vector.broadcast %325 : vector<1x128xf32> to vector<64x128xf32>
    %327 = arith.addf %324, %326 : vector<64x128xf32>
    %c0_106 = arith.constant 0 : index
    %c0_107 = arith.constant 0 : index
    %c0_108 = arith.constant 0 : index
    %328 = vector.load %arg7[%c0_106, %c0_107, %c0_108] : memref<1x64x128xf32, #tpu.memory_space<vmem>>, vector<1x64x128xf32>
    %329 = vector.shape_cast %328 : vector<1x64x128xf32> to vector<64x128xf32>
    %330 = vector.shape_cast %327 : vector<64x128xf32> to vector<1x64x128xf32>
    tpu.vector_store %arg7[%c0_106, %c0_107, %c0_108], %330 {strides = array<i32>} : memref<1x64x128xf32, #tpu.memory_space<vmem>>, vector<1x64x128xf32>,
    return
  }
  func.func @transform_0(%arg0: i32) -> (i32, i32, i32) {
    %c0_i32 = arith.constant 0 : i32
    %c0_i32_0 = arith.constant 0 : i32
    %c0_i32_1 = arith.constant 0 : i32
    return %arg0, %c0_i32, %c0_i32_0 : i32, i32, i32
  }
  func.func @transform_1(%arg0: i32) -> (i32, i32) {
    %c0_i32 = arith.constant 0 : i32
    %c0_i32_0 = arith.constant 0 : i32
    %c0_i32_1 = arith.constant 0 : i32
    return %c0_i32, %c0_i32_0 : i32, i32
  }
  func.func @transform_2(%arg0: i32) -> (i32, i32) {
    %c0_i32 = arith.constant 0 : i32
    %c0_i32_0 = arith.constant 0 : i32
    %c0_i32_1 = arith.constant 0 : i32
    return %c0_i32, %c0_i32_0 : i32, i32
  }
  func.func @transform_3(%arg0: i32) -> (i32, i32) {
    %c0_i32 = arith.constant 0 : i32
    %c0_i32_0 = arith.constant 0 : i32
    %c0_i32_1 = arith.constant 0 : i32
    return %c0_i32, %c0_i32_0 : i32, i32
  }
  func.func @transform_4(%arg0: i32) -> (i32, i32) {
    %c0_i32 = arith.constant 0 : i32
    %c0_i32_0 = arith.constant 0 : i32
    %c0_i32_1 = arith.constant 0 : i32
    return %c0_i32, %c0_i32_0 : i32, i32
  }
  func.func @transform_5(%arg0: i32) -> (i32, i32) {
    %c0_i32 = arith.constant 0 : i32
    %c0_i32_0 = arith.constant 0 : i32
    %c0_i32_1 = arith.constant 0 : i32
    return %c0_i32, %c0_i32_0 : i32, i32
  }
  func.func @transform_6(%arg0: i32) -> (i32, i32, i32) {
    %c0_i32 = arith.constant 0 : i32
    %c0_i32_0 = arith.constant 0 : i32
    %c0_i32_1 = arith.constant 0 : i32
    return %arg0, %c0_i32, %c0_i32_0 : i32, i32, i32
  }
}

</mosaic_0001>

<llo_original>
// kernel: tpu_custom_call.1
$region0: #{tpu_custom_call.1}
  #allocation0 [shape = 'u32[]', space=smem, size = 0x4, offset = 0x4, fixed_abs, tag = 'smem constant byte address 0x4 - core index']
  #allocation1 [shape = 'u32[144,128]{1,0:T(1,128)}', space=vmem, size = 0x12000, scoped, tag = 'internal scratch']
  #allocation2 [shape = 'f32[64,256]{1,0:T(8,128)}', space=vmem, size = 0x10000, scoped, tag = 'scratch operand']
  #allocation3 [shape = 'f32[64,64]{1,0:T(8,128)}', space=vmem, size = 0x8000, scoped, tag = 'scratch operand']
  %s0 = inlined_call_operand.hbm [shape: bf16[1,64,64], index: 0, kind: input, shape index: {}]
  %s1 = inlined_call_operand.hbm [shape: bf16[64,256], index: 1, kind: input, shape index: {}]
  %s2 = inlined_call_operand.vmem [shape: f32[1,256], index: 2, kind: input, shape index: {}]
  %s3 = inlined_call_operand.hbm [shape: bf16[64,256], index: 3, kind: input, shape index: {}]
  %s4 = inlined_call_operand.hbm [shape: bf16[64,128], index: 4, kind: input, shape index: {}]
  %s5 = inlined_call_operand.vmem [shape: f32[1,128], index: 5, kind: input, shape index: {}]
  %s6 = inlined_call_operand.hbm [shape: f32[1,64,128], index: 6, kind: output, shape index: {}]
  %s7 = sld [smem:[#allocation0]]
  $region50: #{tpu_custom_call.1} parent=0
    _
  %s9 = ssub.s32 1, %s7
  %s10 = scalar_select 0, %s9, %s7
  $region1: #{tpu_custom_call.1} parent=0
    #allocation4 [shape = 'u8[16384]{0}', space=vmem, size = 0x4000, scoped, tag = 'input window, operand 0, single buffered']
    #allocation5 [shape = 's32[1]{0}', space=sflag, size = 0x4, scoped, tag = 'scoped memory for tpu_custom_call.1']
    #allocation6 [shape = 's32[1]{0}', space=sflag, size = 0x4, scoped, tag = 'scoped memory for tpu_custom_call.1']
    #allocation7 [shape = 'u8[32768]{0}', space=vmem, size = 0x8000, scoped, tag = 'input window, operand 1, single buffered']
    #allocation8 [shape = 's32[1]{0}', space=sflag, size = 0x4, scoped, tag = 'scoped memory for tpu_custom_call.1']
    #allocation9 [shape = 'u8[32768]{0}', space=vmem, size = 0x8000, scoped, tag = 'input window, operand 3, single buffered']
    #allocation10 [shape = 'u8[16384]{0}', space=vmem, size = 0x4000, scoped, tag = 'input window, operand 4, single buffered']
    #allocation11 [shape = 's32[1]{0}', space=sflag, size = 0x4, scoped, tag = 'scoped memory for tpu_custom_call.1']
    #allocation12 [shape = 'u8[32768]{0}', space=vmem, size = 0x8000, scoped, tag = 'output window, operand 0, single buffered']
    %11 = vsyncpa [#allocation5], 0
    %12 = vsyncpa [#allocation8], 0
    %13 = vsyncpa [#allocation11], 0
    %14 = vsyncpa [#allocation6], 0
    // Predicated region
    $region2: #{tpu_custom_call.1} parent=1 // pred_check
      _
    $region3: #{tpu_custom_call.1} parent=1 // pred_check_branch
      %16 = sbr.rel (0) target = $region5
    $region4: #{tpu_custom_call.1} parent=1 // pred_region
      %s18 = ssub.s32 512, 512
      %19 = vsyncadd [#allocation5], %s18
      %s20 = sshll.u32 [#allocation4], 4
      %s21 = int_to_ptr.vmem [resolvable:$true] %s20
      %26 = dma.hbm_to_vmem [thread:$0]  %s0, 512, %s21, [#allocation5], 64, 64, 4
    $region5: #{tpu_custom_call.1} parent=1 // pred_fallthru
      _
    // Predicated region
    $region6: #{tpu_custom_call.1} parent=1 // pred_check
      _
    $region7: #{tpu_custom_call.1} parent=1 // pred_check_branch
      %28 = sbr.rel (0) target = $region9
    $region8: #{tpu_custom_call.1} parent=1 // pred_region
      %s30 = ssub.s32 1024, 1024
      %31 = vsyncadd [#allocation8], %s30
      %s32 = sshll.u32 [#allocation7], 4
      %s33 = int_to_ptr.vmem [resolvable:$true] %s32
      %38 = dma.hbm_to_vmem [thread:$0]  %s1, 1024, %s33, [#allocation8], 128, 128, 8
    $region9: #{tpu_custom_call.1} parent=1 // pred_fallthru
      _
    // Predicated region
    $region10: #{tpu_custom_call.1} parent=1 // pred_check
      _
    $region11: #{tpu_custom_call.1} parent=1 // pred_check_branch
      %40 = sbr.rel (0) target = $region13
    $region12: #{tpu_custom_call.1} parent=1 // pred_region
      _
    $region13: #{tpu_custom_call.1} parent=1 // pred_fallthru
      _
    // Predicated region
    $region14: #{tpu_custom_call.1} parent=1 // pred_check
      _
    $region15: #{tpu_custom_call.1} parent=1 // pred_check_branch
      %42 = sbr.rel (0) target = $region17
    $region16: #{tpu_custom_call.1} parent=1 // pred_region
      %s44 = ssub.s32 1024, 1024
      %45 = vsyncadd [#allocation8], %s44
      %s46 = sshll.u32 [#allocation9], 4
      %s47 = int_to_ptr.vmem [resolvable:$true] %s46
      %52 = dma.hbm_to_vmem [thread:$0]  %s3, 1024, %s47, [#allocation8], 128, 128, 8
    $region17: #{tpu_custom_call.1} parent=1 // pred_fallthru
      _
    // Predicated region
    $region18: #{tpu_custom_call.1} parent=1 // pred_check
      _
    $region19: #{tpu_custom_call.1} parent=1 // pred_check_branch
      %54 = sbr.rel (0) target = $region21
    $region20: #{tpu_custom_call.1} parent=1 // pred_region
      %s56 = ssub.s32 512, 512
      %57 = vsyncadd [#allocation11], %s56
      %s58 = sshll.u32 [#allocation10], 4
      %s59 = int_to_ptr.vmem [resolvable:$true] %s58
      %64 = dma.hbm_to_vmem [thread:$0]  %s4, 512, %s59, [#allocation11], 64, 64, 4
    $region21: #{tpu_custom_call.1} parent=1 // pred_fallthru
      _
    // Predicated region
    $region22: #{tpu_custom_call.1} parent=1 // pred_check
      _
    $region23: #{tpu_custom_call.1} parent=1 // pred_check_branch
      %66 = sbr.rel (0) target = $region25
    $region24: #{tpu_custom_call.1} parent=1 // pred_region
      _
    $region25: #{tpu_custom_call.1} parent=1 // pred_fallthru
      _
    // Predicated region
    $region26: #{tpu_custom_call.1} parent=1 // pred_check
      _
    $region27: #{tpu_custom_call.1} parent=1 // pred_check_branch
      %68 = sbr.rel (0) target = $region29
    $region28: #{tpu_custom_call.1} parent=1 // pred_region
      %69 = dma.done [#allocation5], 512
    $region29: #{tpu_custom_call.1} parent=1 // pred_fallthru
      _
    // Predicated region
    $region30: #{tpu_custom_call.1} parent=1 // pred_check
      _
    $region31: #{tpu_custom_call.1} parent=1 // pred_check_branch
      %71 = sbr.rel (0) target = $region33
    $region32: #{tpu_custom_call.1} parent=1 // pred_region
      %72 = dma.done [#allocation8], 1024
    $region33: #{tpu_custom_call.1} parent=1 // pred_fallthru
      _
    // Predicated region
    $region34: #{tpu_custom_call.1} parent=1 // pred_check
      _
    $region35: #{tpu_custom_call.1} parent=1 // pred_check_branch
      %74 = sbr.rel (0) target = $region37
    $region36: #{tpu_custom_call.1} parent=1 // pred_region
      %75 = dma.done [#allocation8], 1024
    $region37: #{tpu_custom_call.1} parent=1 // pred_fallthru
      _
    // Predicated region
    $region38: #{tpu_custom_call.1} parent=1 // pred_check
      _
    $region39: #{tpu_custom_call.1} parent=1 // pred_check_branch
      %77 = sbr.rel (0) target = $region41
    $region40: #{tpu_custom_call.1} parent=1 // pred_region
      %78 = dma.done [#allocation11], 512
    $region41: #{tpu_custom_call.1} parent=1 // pred_fallthru
      _
    %v80 = vld [vmem:[#allocation4] sm:$0xf]
    %v81 = vld [vmem:[#allocation4 + $0x4] sm:$0xf]
    %v82 = vld [vmem:[#allocation4 + $0x8] sm:$0xf]
    %v83 = vld [vmem:[#allocation4 + $0xc] sm:$0xf]
    %v84 = vld [vmem:[#allocation4 + $0x10] sm:$0xf]
    %v85 = vld [vmem:[#allocation4 + $0x14] sm:$0xf]
    %v86 = vld [vmem:[#allocation4 + $0x18] sm:$0xf]
    %v87 = vld [vmem:[#allocation4 + $0x1c] sm:$0xf]
    %v88 = vld [vmem:[#allocation7] sm:$0xff]
    %v89 = vld [vmem:[#allocation7 + $0x8] sm:$0xff]
    %v90 = vld [vmem:[#allocation7 + $0x10] sm:$0xff]
    %v91 = vld [vmem:[#allocation7 + $0x18] sm:$0xff]
    %v92 = vld [vmem:[#allocation7 + $0x20] sm:$0xff]
    %v93 = vld [vmem:[#allocation7 + $0x28] sm:$0xff]
    %v94 = vld [vmem:[#allocation7 + $0x30] sm:$0xff]
    %v95 = vld [vmem:[#allocation7 + $0x38] sm:$0xff]
    %v96 = vld [vmem:[%s2] sm:$0x3]
    %v98 = vlaneseq
    %v99 = vshrl.u32 %v98, 7
    %v100 = vsub.s32 0, %v99
    %v101 = vrot.slane %v96, %v100
    %v102 = vlaneseq
    %v103 = vshrl.u32 %v102, 7
    %v104 = vsub.s32 1, %v103
    %v105 = vrot.slane %v96, %v104
    %v116 = vunpack.c.l.b16 %v80
    %v117 = vunpack.c.l.b16 %v81
    %v118 = vunpack.c.l.b16 %v82
    %v119 = vunpack.c.l.b16 %v83
    %v120 = vunpack.c.l.b16 %v84
    %v121 = vunpack.c.l.b16 %v85
    %v122 = vunpack.c.l.b16 %v86
    %v123 = vunpack.c.l.b16 %v87
    %v124 = vpack.c.b16 %v117, %v116
    %v125 = vpack.c.b16 %v119, %v118
    %v126 = vpack.c.b16 %v121, %v120
    %v127 = vpack.c.b16 %v123, %v122
    %v136 = vunpack.c.l.b16 %v88
    %v137 = vunpack.c.h.b16 %v88
    %v138 = vunpack.c.l.b16 %v89
    %v139 = vunpack.c.h.b16 %v89
    %v140 = vunpack.c.l.b16 %v90
    %v141 = vunpack.c.h.b16 %v90
    %v142 = vunpack.c.l.b16 %v91
    %v143 = vunpack.c.h.b16 %v91
    %v144 = vunpack.c.l.b16 %v92
    %v145 = vunpack.c.h.b16 %v92
    %v146 = vunpack.c.l.b16 %v93
    %v147 = vunpack.c.h.b16 %v93
    %v148 = vunpack.c.l.b16 %v94
    %v149 = vunpack.c.h.b16 %v94
    %v150 = vunpack.c.l.b16 %v95
    %v151 = vunpack.c.h.b16 %v95
    %v152 = vpack.c.b16 %v138, %v136
    %v153 = vpack.c.b16 %v139, %v137
    %v154 = vpack.c.b16 %v142, %v140
    %v155 = vpack.c.b16 %v143, %v141
    %v156 = vpack.c.b16 %v146, %v144
    %v157 = vpack.c.b16 %v147, %v145
    %v158 = vpack.c.b16 %v150, %v148
    %v159 = vpack.c.b16 %v151, %v149
    %vm168 = vcmask 523264
    %v170 = vsel %vm168, %v124, 0
    %v173 = vsel %vm168, %v125, 0
    %v176 = vsel %vm168, %v126, 0
    %v179 = vsel %vm168, %v127, 0
    %181 = vmatprep.subr.bf16.mxu0 %v153
    %182 = vmatpush1.bf16.msra.mxu0 %v152
    %183 = vmatprep.subr.bf16.mxu0 %v155
    %184 = vmatpush1.bf16.msra.mxu0 %v154
    %185 = vmatprep.subr.bf16.mxu0 %v157
    %186 = vmatpush1.bf16.msra.mxu0 %v156
    %187 = vmatprep.subr.bf16.mxu0 %v159
    %188 = vmatpush1.bf16.msra.mxu0 %v158
    %189 = vmatprep.subr.bf16.mxu0 0
    %190 = vmatpush1.bf16.msra.mxu0 0
    %191 = vmatprep.subr.bf16.mxu0 0
    %192 = vmatpush1.bf16.msra.mxu0 0
    %193 = vmatprep.subr.bf16.mxu0 0
    %194 = vmatpush1.bf16.msra.mxu0 0
    %195 = vmatprep.subr.bf16.mxu0 0
    %196 = vmatpush1.bf16.msra.mxu0 0
    %197 = vmatprep.subr.bf16.mxu0 0
    %198 = vmatpush1.bf16.msra.mxu0 0
    %199 = vmatprep.subr.bf16.mxu0 0
    %200 = vmatpush1.bf16.msra.mxu0 0
    %201 = vmatprep.subr.bf16.mxu0 0
    %202 = vmatpush1.bf16.msra.mxu0 0
    %203 = vmatprep.subr.bf16.mxu0 0
    %204 = vmatpush1.bf16.msra.mxu0 0
    %205 = vmatprep.subr.bf16.mxu0 0
    %206 = vmatpush1.bf16.msra.mxu0 0
    %207 = vmatprep.subr.bf16.mxu0 0
    %208 = vmatpush1.bf16.msra.mxu0 0
    %209 = vmatprep.subr.bf16.mxu0 0
    %210 = vmatpush1.bf16.msra.mxu0 0
    %211 = vmatprep.subr.bf16.mxu0 0
    %212 = vmatpush1.bf16.msra.mxu0 0
    %213 = vmatprep.mubr.bf16.mxu0 0
    %214 = vmatmul.mubr.bf16.gmra.mrb[0].mxu0 %v170
    %v215 = vpop.f32.mrb[0].mxu0
    %v216 = vadd.f32 %v101, %v215
    %v217 = vpop.f32.mrb[0].mxu0
    %v218 = vadd.f32 %v105, %v217
    %v219 = vpop.f32.mrb[0].mxu0
    %v220 = vadd.f32 %v101, %v219
    %v221 = vpop.f32.mrb[0].mxu0
    %v222 = vadd.f32 %v105, %v221
    %223 = vmatprep.mubr.bf16.mxu0 0
    %224 = vmatmul.mubr.bf16.gmra.mrb[0].mxu0 %v173
    %v225 = vpop.f32.mrb[0].mxu0
    %v226 = vadd.f32 %v101, %v225
    %v227 = vpop.f32.mrb[0].mxu0
    %v228 = vadd.f32 %v105, %v227
    %v229 = vpop.f32.mrb[0].mxu0
    %v230 = vadd.f32 %v101, %v229
    %v231 = vpop.f32.mrb[0].mxu0
    %v232 = vadd.f32 %v105, %v231
    %233 = vmatprep.mubr.bf16.mxu0 0
    %234 = vmatmul.mubr.bf16.gmra.mrb[0].mxu0 %v176
    %v235 = vpop.f32.mrb[0].mxu0
    %v236 = vadd.f32 %v101, %v235
    %v237 = vpop.f32.mrb[0].mxu0
    %v238 = vadd.f32 %v105, %v237
    %v239 = vpop.f32.mrb[0].mxu0
    %v240 = vadd.f32 %v101, %v239
    %v241 = vpop.f32.mrb[0].mxu0
    %v242 = vadd.f32 %v105, %v241
    %243 = vmatprep.mubr.bf16.mxu0 0
    %244 = vmatmul.mubr.bf16.gmra.mrb[0].mxu0 %v179
    %v245 = vpop.f32.mrb[0].mxu0
    %v246 = vadd.f32 %v101, %v245
    %v247 = vpop.f32.mrb[0].mxu0
    %v248 = vadd.f32 %v105, %v247
    %v249 = vpop.f32.mrb[0].mxu0
    %v250 = vadd.f32 %v101, %v249
    %v251 = vpop.f32.mrb[0].mxu0
    %v252 = vadd.f32 %v105, %v251
    %253 = vdwg.mxu0
    %254 = vst [vmem:[#allocation2] sm:$0xff] %v216
    %255 = vst [vmem:[#allocation2 + $0x8] sm:$0xff] %v218
    %256 = vst [vmem:[#allocation2 + $0x10] sm:$0xff] %v220
    %257 = vst [vmem:[#allocation2 + $0x18] sm:$0xff] %v222
    %258 = vst [vmem:[#allocation2 + $0x20] sm:$0xff] %v226
    %259 = vst [vmem:[#allocation2 + $0x28] sm:$0xff] %v228
    %260 = vst [vmem:[#allocation2 + $0x30] sm:$0xff] %v230
    %261 = vst [vmem:[#allocation2 + $0x38] sm:$0xff] %v232
    %262 = vst [vmem:[#allocation2 + $0x40] sm:$0xff] %v236
    %263 = vst [vmem:[#allocation2 + $0x48] sm:$0xff] %v238
    %264 = vst [vmem:[#allocation2 + $0x50] sm:$0xff] %v240
    %265 = vst [vmem:[#allocation2 + $0x58] sm:$0xff] %v242
    %266 = vst [vmem:[#allocation2 + $0x60] sm:$0xff] %v246
    %267 = vst [vmem:[#allocation2 + $0x68] sm:$0xff] %v248
    %268 = vst [vmem:[#allocation2 + $0x70] sm:$0xff] %v250
    %269 = vst [vmem:[#allocation2 + $0x78] sm:$0xff] %v252
    %v270 = vlaneseq
    %v271 = vand.u32 %v270, 127
    %v272 = vadd.s32 %v271, 128
    %vm273 = vcmp.ge.s32.totalorder %v271, 128
    %vm274 = vcmp.ge.s32.totalorder %v272, 128
    %vm275 = vcmp.lt.s32.totalorder %v271, 192
    %vm276 = vcmp.lt.s32.totalorder %v272, 192
    %vm277 = vmand %vm273, %vm275
    %vm278 = vmand %vm274, %vm276
    %v279 = vld [vmem:[#allocation9] sm:$0xff]
    %v280 = vld [vmem:[#allocation9 + $0x8] sm:$0xff]
    %v281 = vld [vmem:[#allocation9 + $0x10] sm:$0xff]
    %v282 = vld [vmem:[#allocation9 + $0x18] sm:$0xff]
    %v283 = vld [vmem:[#allocation9 + $0x20] sm:$0xff]
    %v284 = vld [vmem:[#allocation9 + $0x28] sm:$0xff]
    %v285 = vld [vmem:[#allocation9 + $0x30] sm:$0xff]
    %v286 = vld [vmem:[#allocation9 + $0x38] sm:$0xff]
    %s287 = smul.u32 0, 2
    %s288 = smul.addr %s287, 8
    %s289 = scalar_lea.vmem [#allocation2], %s288
    %v290 = vld [vmem:[%s289] sm:$0xff]
    %v291 = vld [vmem:[%s289 + $0x8] sm:$0xff]
    %v300 = vunpack.c.l.b16 %v279
    %v301 = vunpack.c.h.b16 %v279
    %v302 = vunpack.c.l.b16 %v280
    %v303 = vunpack.c.h.b16 %v280
    %v304 = vunpack.c.l.b16 %v281
    %v305 = vunpack.c.h.b16 %v281
    %v306 = vunpack.c.l.b16 %v282
    %v307 = vunpack.c.h.b16 %v282
    %v308 = vunpack.c.l.b16 %v283
    %v309 = vunpack.c.h.b16 %v283
    %v310 = vunpack.c.l.b16 %v284
    %v311 = vunpack.c.h.b16 %v284
    %v312 = vunpack.c.l.b16 %v285
    %v313 = vunpack.c.h.b16 %v285
    %v314 = vunpack.c.l.b16 %v286
    %v315 = vunpack.c.h.b16 %v286
    %v316 = vpack.c.b16 %v302, %v300
    %v317 = vpack.c.b16 %v303, %v301
    %v318 = vpack.c.b16 %v306, %v304
    %v319 = vpack.c.b16 %v307, %v305
    %v320 = vpack.c.b16 %v310, %v308
    %v321 = vpack.c.b16 %v311, %v309
    %v322 = vpack.c.b16 %v314, %v312
    %v323 = vpack.c.b16 %v315, %v313
    %v333 = vsel %vm168, 0, 0
    %335 = vmatprep.subr.bf16.mxu0 %v317
    %336 = vmatpush1.bf16.msra.mxu0 %v316
    %337 = vmatprep.subr.bf16.mxu0 %v319
    %338 = vmatpush1.bf16.msra.mxu0 %v318
    %339 = vmatprep.subr.bf16.mxu0 %v321
    %340 = vmatpush1.bf16.msra.mxu0 %v320
    %341 = vmatprep.subr.bf16.mxu0 %v323
    %342 = vmatpush1.bf16.msra.mxu0 %v322
    %343 = vmatprep.subr.bf16.mxu0 0
    %344 = vmatpush1.bf16.msra.mxu0 0
    %345 = vmatprep.subr.bf16.mxu0 0
    %346 = vmatpush1.bf16.msra.mxu0 0
    %347 = vmatprep.subr.bf16.mxu0 0
    %348 = vmatpush1.bf16.msra.mxu0 0
    %349 = vmatprep.subr.bf16.mxu0 0
    %350 = vmatpush1.bf16.msra.mxu0 0
    %351 = vmatprep.subr.bf16.mxu0 0
    %352 = vmatpush1.bf16.msra.mxu0 0
    %353 = vmatprep.subr.bf16.mxu0 0
    %354 = vmatpush1.bf16.msra.mxu0 0
    %355 = vmatprep.subr.bf16.mxu0 0
    %356 = vmatpush1.bf16.msra.mxu0 0
    %357 = vmatprep.subr.bf16.mxu0 0
    %358 = vmatpush1.bf16.msra.mxu0 0
    %359 = vmatprep.subr.bf16.mxu0 0
    %360 = vmatpush1.bf16.msra.mxu0 0
    %361 = vmatprep.subr.bf16.mxu0 0
    %362 = vmatpush1.bf16.msra.mxu0 0
    %363 = vmatprep.subr.bf16.mxu0 0
    %364 = vmatpush1.bf16.msra.mxu0 0
    %365 = vmatprep.subr.bf16.mxu0 0
    %366 = vmatpush1.bf16.msra.mxu0 0
    %367 = vmatprep.mubr.bf16.mxu0 0
    %368 = vmatmul.mubr.bf16.gmra.mrb[0].mxu0 %v333
    %v369 = vpop.f32.mrb[0].mxu0
    %v370 = vadd.f32 %v290, %v369
    %v371 = vpop.f32.mrb[0].mxu0
    %v372 = vadd.f32 %v291, %v371
    %v373 = vpop.f32.mrb[0].mxu0
    %v374 = vpop.f32.mrb[0].mxu0
    %375 = vdwg.mxu0
    %v376 = vmul.f32 %v370, 2.0
    %v377 = vmul.f32 %v372, 2.0
    %v378 = vsel %vm277, %v376, %v370
    %v379 = vsel %vm278, %v377, %v372
    %v380 = vxor.u32 %v378, 2147483648
    %v381 = vxor.u32 %v379, 2147483648
    %v382 = vmul.f32 %v380, 1.442695
    %v383 = vpow.pop %v382
    %v384 = vmul.f32 %v381, 1.442695
    %v385 = vpow.pop %v384
    %v386 = vadd.f32 %v383, 1.0
    %v387 = vadd.f32 %v385, 1.0
    %v388 = vrcp.pop %v386
    %v389 = vmul.f32 1.0, %v388
    %v390 = vrcp.pop %v387
    %v391 = vmul.f32 1.0, %v390
    %v392 = vmul.f32 %v389, 2.0
    %v393 = vmul.f32 %v391, 2.0
    %v394 = vsub.f32 %v392, 1.0
    %v395 = vsub.f32 %v393, 1.0
    %v396 = vsel %vm277, %v394, %v389
    %v397 = vsel %vm278, %v395, %v391
    %v398 = vmul.f32 %v396, 0.0
    %v399 = vmul.f32 %v396, %v397
    %401 = vrot.lane.b32.xlu0 %v399, 64
    %v402 = vpop.permute.xlu0 %401
    %v404 = vadd.f32 %v398, %v402
    %v405 = vtanh.pop %v404
    %v406 = vmul.f32 %v397, %v405
    %408 = vrot.lane.b32.xlu0 %v406, 64
    %v409 = vpop.permute.xlu0 %408
    %vm411 = vcmask 261120
    %412 = vst.msk [vmem:[#allocation3] sm:$0xff] %vm411, %v409
    %s413 = scalar_lea.vmem [#allocation3], 56
    %vm414 = vcmask 523520
    %415 = vst.msk [vmem:[%s413] sm:$0xff] %vm414, %v409
    %s416 = smul.u32 1, 2
    %s417 = smul.addr %s416, 8
    %s418 = scalar_lea.vmem [#allocation2], %s417
    %v419 = vld [vmem:[%s418] sm:$0xff]
    %v420 = vld [vmem:[%s418 + $0x8] sm:$0xff]
    %v421 = vpack.c.bf16 %v406, %v406
    %423 = vrot.lane.b32.xlu0 %v421, 64
    %v424 = vpop.permute.xlu0 %423
    %v426 = vsel %vm168, %v424, 0
    %428 = vmatprep.subr.bf16.mxu0 %v317
    %429 = vmatpush1.bf16.msra.mxu0 %v316
    %430 = vmatprep.subr.bf16.mxu0 %v319
    %431 = vmatpush1.bf16.msra.mxu0 %v318
    %432 = vmatprep.subr.bf16.mxu0 %v321
    %433 = vmatpush1.bf16.msra.mxu0 %v320
    %434 = vmatprep.subr.bf16.mxu0 %v323
    %435 = vmatpush1.bf16.msra.mxu0 %v322
    %436 = vmatprep.subr.bf16.mxu0 0
    %437 = vmatpush1.bf16.msra.mxu0 0
    %438 = vmatprep.subr.bf16.mxu0 0
    %439 = vmatpush1.bf16.msra.mxu0 0
    %440 = vmatprep.subr.bf16.mxu0 0
    %441 = vmatpush1.bf16.msra.mxu0 0
    %442 = vmatprep.subr.bf16.mxu0 0
    %443 = vmatpush1.bf16.msra.mxu0 0
    %444 = vmatprep.subr.bf16.mxu0 0
    %445 = vmatpush1.bf16.msra.mxu0 0
    %446 = vmatprep.subr.bf16.mxu0 0
    %447 = vmatpush1.bf16.msra.mxu0 0
    %448 = vmatprep.subr.bf16.mxu0 0
    %449 = vmatpush1.bf16.msra.mxu0 0
    %450 = vmatprep.subr.bf16.mxu0 0
    %451 = vmatpush1.bf16.msra.mxu0 0
    %452 = vmatprep.subr.bf16.mxu0 0
    %453 = vmatpush1.bf16.msra.mxu0 0
    %454 = vmatprep.subr.bf16.mxu0 0
    %455 = vmatpush1.bf16.msra.mxu0 0
    %456 = vmatprep.subr.bf16.mxu0 0
    %457 = vmatpush1.bf16.msra.mxu0 0
    %458 = vmatprep.subr.bf16.mxu0 0
    %459 = vmatpush1.bf16.msra.mxu0 0
    %460 = vmatprep.mubr.bf16.mxu0 0
    %461 = vmatmul.mubr.bf16.gmra.mrb[0].mxu0 %v426
    %v462 = vpop.f32.mrb[0].mxu0
    %v463 = vadd.f32 %v419, %v462
    %v464 = vpop.f32.mrb[0].mxu0
    %v465 = vadd.f32 %v420, %v464
    %v466 = vpop.f32.mrb[0].mxu0
    %v467 = vpop.f32.mrb[0].mxu0
    %468 = vdwg.mxu0
    %v469 = vmul.f32 %v463, 2.0
    %v470 = vmul.f32 %v465, 2.0
    %v471 = vsel %vm277, %v469, %v463
    %v472 = vsel %vm278, %v470, %v465
    %v473 = vxor.u32 %v471, 2147483648
    %v474 = vxor.u32 %v472, 2147483648
    %v475 = vmul.f32 %v473, 1.442695
    %v476 = vpow.pop %v475
    %v477 = vmul.f32 %v474, 1.442695
    %v478 = vpow.pop %v477
    %v479 = vadd.f32 %v476, 1.0
    %v480 = vadd.f32 %v478, 1.0
    %v481 = vrcp.pop %v479
    %v482 = vmul.f32 1.0, %v481
    %v483 = vrcp.pop %v480
    %v484 = vmul.f32 1.0, %v483
    %v485 = vmul.f32 %v482, 2.0
    %v486 = vmul.f32 %v484, 2.0
    %v487 = vsub.f32 %v485, 1.0
    %v488 = vsub.f32 %v486, 1.0
    %v489 = vsel %vm277, %v487, %v482
    %v490 = vsel %vm278, %v488, %v484
    %v491 = vmul.f32 %v489, %v404
    %v492 = vmul.f32 %v489, %v490
    %494 = vrot.lane.b32.xlu0 %v492, 64
    %v495 = vpop.permute.xlu0 %494
    %v497 = vadd.f32 %v491, %v495
    %v498 = vtanh.pop %v497
    %v499 = vmul.f32 %v490, %v498
    %501 = vrot.lane.b32.xlu0 %v499, 64
    %v502 = vpop.permute.xlu0 %501
    %s504 = scalar_lea.vmem [#allocation3], 8
    %505 = vst.msk [vmem:[%s504] sm:$0xff] %vm411, %v502
    %s506 = scalar_lea.vmem [#allocation3], 48
    %507 = vst.msk [vmem:[%s506] sm:$0xff] %vm414, %v502
    %s508 = smul.u32 2, 2
    %s509 = smul.addr %s508, 8
    %s510 = scalar_lea.vmem [#allocation2], %s509
    %v511 = vld [vmem:[%s510] sm:$0xff]
    %v512 = vld [vmem:[%s510 + $0x8] sm:$0xff]
    %v513 = vpack.c.bf16 %v499, %v499
    %515 = vrot.lane.b32.xlu0 %v513, 64
    %v516 = vpop.permute.xlu0 %515
    %v518 = vsel %vm168, %v516, 0
    %520 = vmatprep.subr.bf16.mxu0 %v317
    %521 = vmatpush1.bf16.msra.mxu0 %v316
    %522 = vmatprep.subr.bf16.mxu0 %v319
    %523 = vmatpush1.bf16.msra.mxu0 %v318
    %524 = vmatprep.subr.bf16.mxu0 %v321
    %525 = vmatpush1.bf16.msra.mxu0 %v320
    %526 = vmatprep.subr.bf16.mxu0 %v323
    %527 = vmatpush1.bf16.msra.mxu0 %v322
    %528 = vmatprep.subr.bf16.mxu0 0
    %529 = vmatpush1.bf16.msra.mxu0 0
    %530 = vmatprep.subr.bf16.mxu0 0
    %531 = vmatpush1.bf16.msra.mxu0 0
    %532 = vmatprep.subr.bf16.mxu0 0
    %533 = vmatpush1.bf16.msra.mxu0 0
    %534 = vmatprep.subr.bf16.mxu0 0
    %535 = vmatpush1.bf16.msra.mxu0 0
    %536 = vmatprep.subr.bf16.mxu0 0
    %537 = vmatpush1.bf16.msra.mxu0 0
    %538 = vmatprep.subr.bf16.mxu0 0
    %539 = vmatpush1.bf16.msra.mxu0 0
    %540 = vmatprep.subr.bf16.mxu0 0
    %541 = vmatpush1.bf16.msra.mxu0 0
    %542 = vmatprep.subr.bf16.mxu0 0
    %543 = vmatpush1.bf16.msra.mxu0 0
    %544 = vmatprep.subr.bf16.mxu0 0
    %545 = vmatpush1.bf16.msra.mxu0 0
    %546 = vmatprep.subr.bf16.mxu0 0
    %547 = vmatpush1.bf16.msra.mxu0 0
    %548 = vmatprep.subr.bf16.mxu0 0
    %549 = vmatpush1.bf16.msra.mxu0 0
    %550 = vmatprep.subr.bf16.mxu0 0
    %551 = vmatpush1.bf16.msra.mxu0 0
    %552 = vmatprep.mubr.bf16.mxu0 0
    %553 = vmatmul.mubr.bf16.gmra.mrb[0].mxu0 %v518
    %v554 = vpop.f32.mrb[0].mxu0
    %v555 = vadd.f32 %v511, %v554
    %v556 = vpop.f32.mrb[0].mxu0
    %v557 = vadd.f32 %v512, %v556
    %v558 = vpop.f32.mrb[0].mxu0
    %v559 = vpop.f32.mrb[0].mxu0
    %560 = vdwg.mxu0
    %v561 = vmul.f32 %v555, 2.0
    %v562 = vmul.f32 %v557, 2.0
    %v563 = vsel %vm277, %v561, %v555
    %v564 = vsel %vm278, %v562, %v557
    %v565 = vxor.u32 %v563, 2147483648
    %v566 = vxor.u32 %v564, 2147483648
    %v567 = vmul.f32 %v565, 1.442695
    %v568 = vpow.pop %v567
    %v569 = vmul.f32 %v566, 1.442695
    %v570 = vpow.pop %v569
    %v571 = vadd.f32 %v568, 1.0
    %v572 = vadd.f32 %v570, 1.0
    %v573 = vrcp.pop %v571
    %v574 = vmul.f32 1.0, %v573
    %v575 = vrcp.pop %v572
    %v576 = vmul.f32 1.0, %v575
    %v577 = vmul.f32 %v574, 2.0
    %v578 = vmul.f32 %v576, 2.0
    %v579 = vsub.f32 %v577, 1.0
    %v580 = vsub.f32 %v578, 1.0
    %v581 = vsel %vm277, %v579, %v574
    %v582 = vsel %vm278, %v580, %v576
    %v583 = vmul.f32 %v581, %v497
    %v584 = vmul.f32 %v581, %v582
    %586 = vrot.lane.b32.xlu0 %v584, 64
    %v587 = vpop.permute.xlu0 %586
    %v589 = vadd.f32 %v583, %v587
    %v590 = vtanh.pop %v589
    %v591 = vmul.f32 %v582, %v590
    %593 = vrot.lane.b32.xlu0 %v591, 64
    %v594 = vpop.permute.xlu0 %593
    %s596 = scalar_lea.vmem [#allocation3], 16
    %597 = vst.msk [vmem:[%s596] sm:$0xff] %vm411, %v594
    %s598 = scalar_lea.vmem [#allocation3], 40
    %599 = vst.msk [vmem:[%s598] sm:$0xff] %vm414, %v594
    %s600 = smul.u32 3, 2
    %s601 = smul.addr %s600, 8
    %s602 = scalar_lea.vmem [#allocation2], %s601
    %v603 = vld [vmem:[%s602] sm:$0xff]
    %v604 = vld [vmem:[%s602 + $0x8] sm:$0xff]
    %v605 = vpack.c.bf16 %v591, %v591
    %607 = vrot.lane.b32.xlu0 %v605, 64
    %v608 = vpop.permute.xlu0 %607
    %v610 = vsel %vm168, %v608, 0
    %612 = vmatprep.subr.bf16.mxu0 %v317
    %613 = vmatpush1.bf16.msra.mxu0 %v316
    %614 = vmatprep.subr.bf16.mxu0 %v319
    %615 = vmatpush1.bf16.msra.mxu0 %v318
    %616 = vmatprep.subr.bf16.mxu0 %v321
    %617 = vmatpush1.bf16.msra.mxu0 %v320
    %618 = vmatprep.subr.bf16.mxu0 %v323
    %619 = vmatpush1.bf16.msra.mxu0 %v322
    %620 = vmatprep.subr.bf16.mxu0 0
    %621 = vmatpush1.bf16.msra.mxu0 0
    %622 = vmatprep.subr.bf16.mxu0 0
    %623 = vmatpush1.bf16.msra.mxu0 0
    %624 = vmatprep.subr.bf16.mxu0 0
    %625 = vmatpush1.bf16.msra.mxu0 0
    %626 = vmatprep.subr.bf16.mxu0 0
    %627 = vmatpush1.bf16.msra.mxu0 0
    %628 = vmatprep.subr.bf16.mxu0 0
    %629 = vmatpush1.bf16.msra.mxu0 0
    %630 = vmatprep.subr.bf16.mxu0 0
    %631 = vmatpush1.bf16.msra.mxu0 0
    %632 = vmatprep.subr.bf16.mxu0 0
    %633 = vmatpush1.bf16.msra.mxu0 0
    %634 = vmatprep.subr.bf16.mxu0 0
    %635 = vmatpush1.bf16.msra.mxu0 0
    %636 = vmatprep.subr.bf16.mxu0 0
    %637 = vmatpush1.bf16.msra.mxu0 0
    %638 = vmatprep.subr.bf16.mxu0 0
    %639 = vmatpush1.bf16.msra.mxu0 0
    %640 = vmatprep.subr.bf16.mxu0 0
    %641 = vmatpush1.bf16.msra.mxu0 0
    %642 = vmatprep.subr.bf16.mxu0 0
    %643 = vmatpush1.bf16.msra.mxu0 0
    %644 = vmatprep.mubr.bf16.mxu0 0
    %645 = vmatmul.mubr.bf16.gmra.mrb[0].mxu0 %v610
    %v646 = vpop.f32.mrb[0].mxu0
    %v647 = vadd.f32 %v603, %v646
    %v648 = vpop.f32.mrb[0].mxu0
    %v649 = vadd.f32 %v604, %v648
    %v650 = vpop.f32.mrb[0].mxu0
    %v651 = vpop.f32.mrb[0].mxu0
    %652 = vdwg.mxu0
    %v653 = vmul.f32 %v647, 2.0
    %v654 = vmul.f32 %v649, 2.0
    %v655 = vsel %vm277, %v653, %v647
    %v656 = vsel %vm278, %v654, %v649
    %v657 = vxor.u32 %v655, 2147483648
    %v658 = vxor.u32 %v656, 2147483648
    %v659 = vmul.f32 %v657, 1.442695
    %v660 = vpow.pop %v659
    %v661 = vmul.f32 %v658, 1.442695
    %v662 = vpow.pop %v661
    %v663 = vadd.f32 %v660, 1.0
    %v664 = vadd.f32 %v662, 1.0
    %v665 = vrcp.pop %v663
    %v666 = vmul.f32 1.0, %v665
    %v667 = vrcp.pop %v664
    %v668 = vmul.f32 1.0, %v667
    %v669 = vmul.f32 %v666, 2.0
    %v670 = vmul.f32 %v668, 2.0
    %v671 = vsub.f32 %v669, 1.0
    %v672 = vsub.f32 %v670, 1.0
    %v673 = vsel %vm277, %v671, %v666
    %v674 = vsel %vm278, %v672, %v668
    %v675 = vmul.f32 %v673, %v589
    %v676 = vmul.f32 %v673, %v674
    %678 = vrot.lane.b32.xlu0 %v676, 64
    %v679 = vpop.permute.xlu0 %678
    %v681 = vadd.f32 %v675, %v679
    %v682 = vtanh.pop %v681
    %v683 = vmul.f32 %v674, %v682
    %685 = vrot.lane.b32.xlu0 %v683, 64
    %v686 = vpop.permute.xlu0 %685
    %s688 = scalar_lea.vmem [#allocation3], 24
    %689 = vst.msk [vmem:[%s688] sm:$0xff] %vm411, %v686
    %s690 = scalar_lea.vmem [#allocation3], 32
    %691 = vst.msk [vmem:[%s690] sm:$0xff] %vm414, %v686
    %s692 = smul.u32 4, 2
    %s693 = smul.addr %s692, 8
    %s694 = scalar_lea.vmem [#allocation2], %s693
    %v695 = vld [vmem:[%s694] sm:$0xff]
    %v696 = vld [vmem:[%s694 + $0x8] sm:$0xff]
    %v697 = vpack.c.bf16 %v683, %v683
    %699 = vrot.lane.b32.xlu0 %v697, 64
    %v700 = vpop.permute.xlu0 %699
    %v702 = vsel %vm168, %v700, 0
    %704 = vmatprep.subr.bf16.mxu0 %v317
    %705 = vmatpush1.bf16.msra.mxu0 %v316
    %706 = vmatprep.subr.bf16.mxu0 %v319
    %707 = vmatpush1.bf16.msra.mxu0 %v318
    %708 = vmatprep.subr.bf16.mxu0 %v321
    %709 = vmatpush1.bf16.msra.mxu0 %v320
    %710 = vmatprep.subr.bf16.mxu0 %v323
    %711 = vmatpush1.bf16.msra.mxu0 %v322
    %712 = vmatprep.subr.bf16.mxu0 0
    %713 = vmatpush1.bf16.msra.mxu0 0
    %714 = vmatprep.subr.bf16.mxu0 0
    %715 = vmatpush1.bf16.msra.mxu0 0
    %716 = vmatprep.subr.bf16.mxu0 0
    %717 = vmatpush1.bf16.msra.mxu0 0
    %718 = vmatprep.subr.bf16.mxu0 0
    %719 = vmatpush1.bf16.msra.mxu0 0
    %720 = vmatprep.subr.bf16.mxu0 0
    %721 = vmatpush1.bf16.msra.mxu0 0
    %722 = vmatprep.subr.bf16.mxu0 0
    %723 = vmatpush1.bf16.msra.mxu0 0
    %724 = vmatprep.subr.bf16.mxu0 0
    %725 = vmatpush1.bf16.msra.mxu0 0
    %726 = vmatprep.subr.bf16.mxu0 0
    %727 = vmatpush1.bf16.msra.mxu0 0
    %728 = vmatprep.subr.bf16.mxu0 0
    %729 = vmatpush1.bf16.msra.mxu0 0
    %730 = vmatprep.subr.bf16.mxu0 0
    %731 = vmatpush1.bf16.msra.mxu0 0
    %732 = vmatprep.subr.bf16.mxu0 0
    %733 = vmatpush1.bf16.msra.mxu0 0
    %734 = vmatprep.subr.bf16.mxu0 0
    %735 = vmatpush1.bf16.msra.mxu0 0
    %736 = vmatprep.mubr.bf16.mxu0 0
    %737 = vmatmul.mubr.bf16.gmra.mrb[0].mxu0 %v702
    %v738 = vpop.f32.mrb[0].mxu0
    %v739 = vadd.f32 %v695, %v738
    %v740 = vpop.f32.mrb[0].mxu0
    %v741 = vadd.f32 %v696, %v740
    %v742 = vpop.f32.mrb[0].mxu0
    %v743 = vpop.f32.mrb[0].mxu0
    %744 = vdwg.mxu0
    %v745 = vmul.f32 %v739, 2.0
    %v746 = vmul.f32 %v741, 2.0
    %v747 = vsel %vm277, %v745, %v739
    %v748 = vsel %vm278, %v746, %v741
    %v749 = vxor.u32 %v747, 2147483648
    %v750 = vxor.u32 %v748, 2147483648
    %v751 = vmul.f32 %v749, 1.442695
    %v752 = vpow.pop %v751
    %v753 = vmul.f32 %v750, 1.442695
    %v754 = vpow.pop %v753
    %v755 = vadd.f32 %v752, 1.0
    %v756 = vadd.f32 %v754, 1.0
    %v757 = vrcp.pop %v755
    %v758 = vmul.f32 1.0, %v757
    %v759 = vrcp.pop %v756
    %v760 = vmul.f32 1.0, %v759
    %v761 = vmul.f32 %v758, 2.0
    %v762 = vmul.f32 %v760, 2.0
    %v763 = vsub.f32 %v761, 1.0
    %v764 = vsub.f32 %v762, 1.0
    %v765 = vsel %vm277, %v763, %v758
    %v766 = vsel %vm278, %v764, %v760
    %v767 = vmul.f32 %v765, %v681
    %v768 = vmul.f32 %v765, %v766
    %770 = vrot.lane.b32.xlu0 %v768, 64
    %v771 = vpop.permute.xlu0 %770
    %v773 = vadd.f32 %v767, %v771
    %v774 = vtanh.pop %v773
    %v775 = vmul.f32 %v766, %v774
    %777 = vrot.lane.b32.xlu0 %v775, 64
    %v778 = vpop.permute.xlu0 %777
    %780 = vst.msk [vmem:[%s690] sm:$0xff] %vm411, %v778
    %781 = vst.msk [vmem:[%s688] sm:$0xff] %vm414, %v778
    %s782 = smul.u32 5, 2
    %s783 = smul.addr %s782, 8
    %s784 = scalar_lea.vmem [#allocation2], %s783
    %v785 = vld [vmem:[%s784] sm:$0xff]
    %v786 = vld [vmem:[%s784 + $0x8] sm:$0xff]
    %v787 = vpack.c.bf16 %v775, %v775
    %789 = vrot.lane.b32.xlu0 %v787, 64
    %v790 = vpop.permute.xlu0 %789
    %v792 = vsel %vm168, %v790, 0
    %794 = vmatprep.subr.bf16.mxu0 %v317
    %795 = vmatpush1.bf16.msra.mxu0 %v316
    %796 = vmatprep.subr.bf16.mxu0 %v319
    %797 = vmatpush1.bf16.msra.mxu0 %v318
    %798 = vmatprep.subr.bf16.mxu0 %v321
    %799 = vmatpush1.bf16.msra.mxu0 %v320
    %800 = vmatprep.subr.bf16.mxu0 %v323
    %801 = vmatpush1.bf16.msra.mxu0 %v322
    %802 = vmatprep.subr.bf16.mxu0 0
    %803 = vmatpush1.bf16.msra.mxu0 0
    %804 = vmatprep.subr.bf16.mxu0 0
    %805 = vmatpush1.bf16.msra.mxu0 0
    %806 = vmatprep.subr.bf16.mxu0 0
    %807 = vmatpush1.bf16.msra.mxu0 0
    %808 = vmatprep.subr.bf16.mxu0 0
    %809 = vmatpush1.bf16.msra.mxu0 0
    %810 = vmatprep.subr.bf16.mxu0 0
    %811 = vmatpush1.bf16.msra.mxu0 0
    %812 = vmatprep.subr.bf16.mxu0 0
    %813 = vmatpush1.bf16.msra.mxu0 0
    %814 = vmatprep.subr.bf16.mxu0 0
    %815 = vmatpush1.bf16.msra.mxu0 0
    %816 = vmatprep.subr.bf16.mxu0 0
    %817 = vmatpush1.bf16.msra.mxu0 0
    %818 = vmatprep.subr.bf16.mxu0 0
    %819 = vmatpush1.bf16.msra.mxu0 0
    %820 = vmatprep.subr.bf16.mxu0 0
    %821 = vmatpush1.bf16.msra.mxu0 0
    %822 = vmatprep.subr.bf16.mxu0 0
    %823 = vmatpush1.bf16.msra.mxu0 0
    %824 = vmatprep.subr.bf16.mxu0 0
    %825 = vmatpush1.bf16.msra.mxu0 0
    %826 = vmatprep.mubr.bf16.mxu0 0
    %827 = vmatmul.mubr.bf16.gmra.mrb[0].mxu0 %v792
    %v828 = vpop.f32.mrb[0].mxu0
    %v829 = vadd.f32 %v785, %v828
    %v830 = vpop.f32.mrb[0].mxu0
    %v831 = vadd.f32 %v786, %v830
    %v832 = vpop.f32.mrb[0].mxu0
    %v833 = vpop.f32.mrb[0].mxu0
    %834 = vdwg.mxu0
    %v835 = vmul.f32 %v829, 2.0
    %v836 = vmul.f32 %v831, 2.0
    %v837 = vsel %vm277, %v835, %v829
    %v838 = vsel %vm278, %v836, %v831
    %v839 = vxor.u32 %v837, 2147483648
    %v840 = vxor.u32 %v838, 2147483648
    %v841 = vmul.f32 %v839, 1.442695
    %v842 = vpow.pop %v841
    %v843 = vmul.f32 %v840, 1.442695
    %v844 = vpow.pop %v843
    %v845 = vadd.f32 %v842, 1.0
    %v846 = vadd.f32 %v844, 1.0
    %v847 = vrcp.pop %v845
    %v848 = vmul.f32 1.0, %v847
    %v849 = vrcp.pop %v846
    %v850 = vmul.f32 1.0, %v849
    %v851 = vmul.f32 %v848, 2.0
    %v852 = vmul.f32 %v850, 2.0
    %v853 = vsub.f32 %v851, 1.0
    %v854 = vsub.f32 %v852, 1.0
    %v855 = vsel %vm277, %v853, %v848
    %v856 = vsel %vm278, %v854, %v850
    %v857 = vmul.f32 %v855, %v773
    %v858 = vmul.f32 %v855, %v856
    %860 = vrot.lane.b32.xlu0 %v858, 64
    %v861 = vpop.permute.xlu0 %860
    %v863 = vadd.f32 %v857, %v861
    %v864 = vtanh.pop %v863
    %v865 = vmul.f32 %v856, %v864
    %867 = vrot.lane.b32.xlu0 %v865, 64
    %v868 = vpop.permute.xlu0 %867
    %870 = vst.msk [vmem:[%s598] sm:$0xff] %vm411, %v868
    %871 = vst.msk [vmem:[%s596] sm:$0xff] %vm414, %v868
    %s872 = smul.u32 6, 2
    %s873 = smul.addr %s872, 8
    %s874 = scalar_lea.vmem [#allocation2], %s873
    %v875 = vld [vmem:[%s874] sm:$0xff]
    %v876 = vld [vmem:[%s874 + $0x8] sm:$0xff]
    %v877 = vpack.c.bf16 %v865, %v865
    %879 = vrot.lane.b32.xlu0 %v877, 64
    %v880 = vpop.permute.xlu0 %879
    %v882 = vsel %vm168, %v880, 0
    %884 = vmatprep.subr.bf16.mxu0 %v317
    %885 = vmatpush1.bf16.msra.mxu0 %v316
    %886 = vmatprep.subr.bf16.mxu0 %v319
    %887 = vmatpush1.bf16.msra.mxu0 %v318
    %888 = vmatprep.subr.bf16.mxu0 %v321
    %889 = vmatpush1.bf16.msra.mxu0 %v320
    %890 = vmatprep.subr.bf16.mxu0 %v323
    %891 = vmatpush1.bf16.msra.mxu0 %v322
    %892 = vmatprep.subr.bf16.mxu0 0
    %893 = vmatpush1.bf16.msra.mxu0 0
    %894 = vmatprep.subr.bf16.mxu0 0
    %895 = vmatpush1.bf16.msra.mxu0 0
    %896 = vmatprep.subr.bf16.mxu0 0
    %897 = vmatpush1.bf16.msra.mxu0 0
    %898 = vmatprep.subr.bf16.mxu0 0
    %899 = vmatpush1.bf16.msra.mxu0 0
    %900 = vmatprep.subr.bf16.mxu0 0
    %901 = vmatpush1.bf16.msra.mxu0 0
    %902 = vmatprep.subr.bf16.mxu0 0
    %903 = vmatpush1.bf16.msra.mxu0 0
    %904 = vmatprep.subr.bf16.mxu0 0
    %905 = vmatpush1.bf16.msra.mxu0 0
    %906 = vmatprep.subr.bf16.mxu0 0
    %907 = vmatpush1.bf16.msra.mxu0 0
    %908 = vmatprep.subr.bf16.mxu0 0
    %909 = vmatpush1.bf16.msra.mxu0 0
    %910 = vmatprep.subr.bf16.mxu0 0
    %911 = vmatpush1.bf16.msra.mxu0 0
    %912 = vmatprep.subr.bf16.mxu0 0
    %913 = vmatpush1.bf16.msra.mxu0 0
    %914 = vmatprep.subr.bf16.mxu0 0
    %915 = vmatpush1.bf16.msra.mxu0 0
    %916 = vmatprep.mubr.bf16.mxu0 0
    %917 = vmatmul.mubr.bf16.gmra.mrb[0].mxu0 %v882
    %v918 = vpop.f32.mrb[0].mxu0
    %v919 = vadd.f32 %v875, %v918
    %v920 = vpop.f32.mrb[0].mxu0
    %v921 = vadd.f32 %v876, %v920
    %v922 = vpop.f32.mrb[0].mxu0
    %v923 = vpop.f32.mrb[0].mxu0
    %924 = vdwg.mxu0
    %v925 = vmul.f32 %v919, 2.0
    %v926 = vmul.f32 %v921, 2.0
    %v927 = vsel %vm277, %v925, %v919
    %v928 = vsel %vm278, %v926, %v921
    %v929 = vxor.u32 %v927, 2147483648
    %v930 = vxor.u32 %v928, 2147483648
    %v931 = vmul.f32 %v929, 1.442695
    %v932 = vpow.pop %v931
    %v933 = vmul.f32 %v930, 1.442695
    %v934 = vpow.pop %v933
    %v935 = vadd.f32 %v932, 1.0
    %v936 = vadd.f32 %v934, 1.0
    %v937 = vrcp.pop %v935
    %v938 = vmul.f32 1.0, %v937
    %v939 = vrcp.pop %v936
    %v940 = vmul.f32 1.0, %v939
    %v941 = vmul.f32 %v938, 2.0
    %v942 = vmul.f32 %v940, 2.0
    %v943 = vsub.f32 %v941, 1.0
    %v944 = vsub.f32 %v942, 1.0
    %v945 = vsel %vm277, %v943, %v938
    %v946 = vsel %vm278, %v944, %v940
    %v947 = vmul.f32 %v945, %v863
    %v948 = vmul.f32 %v945, %v946
    %950 = vrot.lane.b32.xlu0 %v948, 64
    %v951 = vpop.permute.xlu0 %950
    %v953 = vadd.f32 %v947, %v951
    %v954 = vtanh.pop %v953
    %v955 = vmul.f32 %v946, %v954
    %957 = vrot.lane.b32.xlu0 %v955, 64
    %v958 = vpop.permute.xlu0 %957
    %960 = vst.msk [vmem:[%s506] sm:$0xff] %vm411, %v958
    %961 = vst.msk [vmem:[%s504] sm:$0xff] %vm414, %v958
    %s962 = smul.u32 7, 2
    %s963 = smul.addr %s962, 8
    %s964 = scalar_lea.vmem [#allocation2], %s963
    %v965 = vld [vmem:[%s964] sm:$0xff]
    %v966 = vld [vmem:[%s964 + $0x8] sm:$0xff]
    %v967 = vpack.c.bf16 %v955, %v955
    %969 = vrot.lane.b32.xlu0 %v967, 64
    %v970 = vpop.permute.xlu0 %969
    %v972 = vsel %vm168, %v970, 0
    %974 = vmatprep.subr.bf16.mxu0 %v317
    %975 = vmatpush1.bf16.msra.mxu0 %v316
    %976 = vmatprep.subr.bf16.mxu0 %v319
    %977 = vmatpush1.bf16.msra.mxu0 %v318
    %978 = vmatprep.subr.bf16.mxu0 %v321
    %979 = vmatpush1.bf16.msra.mxu0 %v320
    %980 = vmatprep.subr.bf16.mxu0 %v323
    %981 = vmatpush1.bf16.msra.mxu0 %v322
    %982 = vmatprep.subr.bf16.mxu0 0
    %983 = vmatpush1.bf16.msra.mxu0 0
    %984 = vmatprep.subr.bf16.mxu0 0
    %985 = vmatpush1.bf16.msra.mxu0 0
    %986 = vmatprep.subr.bf16.mxu0 0
    %987 = vmatpush1.bf16.msra.mxu0 0
    %988 = vmatprep.subr.bf16.mxu0 0
    %989 = vmatpush1.bf16.msra.mxu0 0
    %990 = vmatprep.subr.bf16.mxu0 0
    %991 = vmatpush1.bf16.msra.mxu0 0
    %992 = vmatprep.subr.bf16.mxu0 0
    %993 = vmatpush1.bf16.msra.mxu0 0
    %994 = vmatprep.subr.bf16.mxu0 0
    %995 = vmatpush1.bf16.msra.mxu0 0
    %996 = vmatprep.subr.bf16.mxu0 0
    %997 = vmatpush1.bf16.msra.mxu0 0
    %998 = vmatprep.subr.bf16.mxu0 0
    %999 = vmatpush1.bf16.msra.mxu0 0
    %1000 = vmatprep.subr.bf16.mxu0 0
    %1001 = vmatpush1.bf16.msra.mxu0 0
    %1002 = vmatprep.subr.bf16.mxu0 0
    %1003 = vmatpush1.bf16.msra.mxu0 0
    %1004 = vmatprep.subr.bf16.mxu0 0
    %1005 = vmatpush1.bf16.msra.mxu0 0
    %1006 = vmatprep.mubr.bf16.mxu0 0
    %1007 = vmatmul.mubr.bf16.gmra.mrb[0].mxu0 %v972
    %v1008 = vpop.f32.mrb[0].mxu0
    %v1009 = vadd.f32 %v965, %v1008
    %v1010 = vpop.f32.mrb[0].mxu0
    %v1011 = vadd.f32 %v966, %v1010
    %v1012 = vpop.f32.mrb[0].mxu0
    %v1013 = vpop.f32.mrb[0].mxu0
    %1014 = vdwg.mxu0
    %v1015 = vmul.f32 %v1009, 2.0
    %v1016 = vmul.f32 %v1011, 2.0
    %v1017 = vsel %vm277, %v1015, %v1009
    %v1018 = vsel %vm278, %v1016, %v1011
    %v1019 = vxor.u32 %v1017, 2147483648
    %v1020 = vxor.u32 %v1018, 2147483648
    %v1021 = vmul.f32 %v1019, 1.442695
    %v1022 = vpow.pop %v1021
    %v1023 = vmul.f32 %v1020, 1.442695
    %v1024 = vpow.pop %v1023
    %v1025 = vadd.f32 %v1022, 1.0
    %v1026 = vadd.f32 %v1024, 1.0
    %v1027 = vrcp.pop %v1025
    %v1028 = vmul.f32 1.0, %v1027
    %v1029 = vrcp.pop %v1026
    %v1030 = vmul.f32 1.0, %v1029
    %v1031 = vmul.f32 %v1028, 2.0
    %v1032 = vmul.f32 %v1030, 2.0
    %v1033 = vsub.f32 %v1031, 1.0
    %v1034 = vsub.f32 %v1032, 1.0
    %v1035 = vsel %vm277, %v1033, %v1028
    %v1036 = vsel %vm278, %v1034, %v1030
    %v1037 = vmul.f32 %v1035, %v953
    %v1038 = vmul.f32 %v1035, %v1036
    %1040 = vrot.lane.b32.xlu0 %v1038, 64
    %v1041 = vpop.permute.xlu0 %1040
    %v1043 = vadd.f32 %v1037, %v1041
    %v1044 = vtanh.pop %v1043
    %v1045 = vmul.f32 %v1036, %v1044
    %1047 = vrot.lane.b32.xlu0 %v1045, 64
    %v1048 = vpop.permute.xlu0 %1047
    %1050 = vst.msk [vmem:[%s413] sm:$0xff] %vm411, %v1048
    %1051 = vst.msk [vmem:[#allocation3] sm:$0xff] %vm414, %v1048
    %v1052 = vld [vmem:[#allocation3] sm:$0xff]
    %v1053 = vld [vmem:[#allocation3 + $0x8] sm:$0xff]
    %v1054 = vld [vmem:[#allocation3 + $0x10] sm:$0xff]
    %v1055 = vld [vmem:[#allocation3 + $0x18] sm:$0xff]
    %v1056 = vld [vmem:[#allocation3 + $0x20] sm:$0xff]
    %v1057 = vld [vmem:[#allocation3 + $0x28] sm:$0xff]
    %v1058 = vld [vmem:[#allocation3 + $0x30] sm:$0xff]
    %v1059 = vld [vmem:[#allocation3 + $0x38] sm:$0xff]
    %v1060 = vpack.c.bf16 %v1053, %v1052
    %v1061 = vpack.c.bf16 %v1055, %v1054
    %v1062 = vpack.c.bf16 %v1057, %v1056
    %v1063 = vpack.c.bf16 %v1059, %v1058
    %v1064 = vld [vmem:[#allocation10] sm:$0xf]
    %v1065 = vld [vmem:[#allocation10 + $0x4] sm:$0xf]
    %v1066 = vld [vmem:[#allocation10 + $0x8] sm:$0xf]
    %v1067 = vld [vmem:[#allocation10 + $0xc] sm:$0xf]
    %v1068 = vld [vmem:[#allocation10 + $0x10] sm:$0xf]
    %v1069 = vld [vmem:[#allocation10 + $0x14] sm:$0xf]
    %v1070 = vld [vmem:[#allocation10 + $0x18] sm:$0xf]
    %v1071 = vld [vmem:[#allocation10 + $0x1c] sm:$0xf]
    %v1072 = vld [vmem:[%s5] sm:$0x1]
    %v1074 = vlaneseq
    %v1075 = vshrl.u32 %v1074, 7
    %v1076 = vsub.s32 0, %v1075
    %v1077 = vrot.slane %v1072, %v1076
    %v1087 = vunpack.c.l.b16 %v1064
    %v1088 = vunpack.c.l.b16 %v1065
    %v1089 = vunpack.c.l.b16 %v1066
    %v1090 = vunpack.c.l.b16 %v1067
    %v1091 = vunpack.c.l.b16 %v1068
    %v1092 = vunpack.c.l.b16 %v1069
    %v1093 = vunpack.c.l.b16 %v1070
    %v1094 = vunpack.c.l.b16 %v1071
    %v1095 = vpack.c.b16 %v1088, %v1087
    %v1096 = vpack.c.b16 %v1090, %v1089
    %v1097 = vpack.c.b16 %v1092, %v1091
    %v1098 = vpack.c.b16 %v1094, %v1093
    %v1104 = vsel %vm168, %v1060, 0
    %v1107 = vsel %vm168, %v1061, 0
    %v1110 = vsel %vm168, %v1062, 0
    %v1113 = vsel %vm168, %v1063, 0
    %1115 = vmatprep.subr.bf16.mxu0 0
    %1116 = vmatpush1.bf16.msra.mxu0 %v1095
    %1117 = vmatprep.subr.bf16.mxu0 0
    %1118 = vmatpush1.bf16.msra.mxu0 %v1096
    %1119 = vmatprep.subr.bf16.mxu0 0
    %1120 = vmatpush1.bf16.msra.mxu0 %v1097
    %1121 = vmatprep.subr.bf16.mxu0 0
    %1122 = vmatpush1.bf16.msra.mxu0 %v1098
    %1123 = vmatprep.subr.bf16.mxu0 0
    %1124 = vmatpush1.bf16.msra.mxu0 0
    %1125 = vmatprep.subr.bf16.mxu0 0
    %1126 = vmatpush1.bf16.msra.mxu0 0
    %1127 = vmatprep.subr.bf16.mxu0 0
    %1128 = vmatpush1.bf16.msra.mxu0 0
    %1129 = vmatprep.subr.bf16.mxu0 0
    %1130 = vmatpush1.bf16.msra.mxu0 0
    %1131 = vmatprep.subr.bf16.mxu0 0
    %1132 = vmatpush1.bf16.msra.mxu0 0
    %1133 = vmatprep.subr.bf16.mxu0 0
    %1134 = vmatpush1.bf16.msra.mxu0 0
    %1135 = vmatprep.subr.bf16.mxu0 0
    %1136 = vmatpush1.bf16.msra.mxu0 0
    %1137 = vmatprep.subr.bf16.mxu0 0
    %1138 = vmatpush1.bf16.msra.mxu0 0
    %1139 = vmatprep.subr.bf16.mxu0 0
    %1140 = vmatpush1.bf16.msra.mxu0 0
    %1141 = vmatprep.subr.bf16.mxu0 0
    %1142 = vmatpush1.bf16.msra.mxu0 0
    %1143 = vmatprep.subr.bf16.mxu0 0
    %1144 = vmatpush1.bf16.msra.mxu0 0
    %1145 = vmatprep.subr.bf16.mxu0 0
    %1146 = vmatpush1.bf16.msra.mxu0 0
    %1147 = vmatprep.mubr.bf16.mxu0 0
    %1148 = vmatmul.mubr.bf16.gmra.mrb[0].mxu0 %v1104
    %v1149 = vpop.f32.mrb[0].mxu0
    %v1150 = vadd.f32 %v1077, %v1149
    %v1151 = vpop.f32.mrb[0].mxu0
    %v1152 = vpop.f32.mrb[0].mxu0
    %v1153 = vadd.f32 %v1077, %v1152
    %v1154 = vpop.f32.mrb[0].mxu0
    %1155 = vmatprep.mubr.bf16.mxu0 0
    %1156 = vmatmul.mubr.bf16.gmra.mrb[0].mxu0 %v1107
    %v1157 = vpop.f32.mrb[0].mxu0
    %v1158 = vadd.f32 %v1077, %v1157
    %v1159 = vpop.f32.mrb[0].mxu0
    %v1160 = vpop.f32.mrb[0].mxu0
    %v1161 = vadd.f32 %v1077, %v1160
    %v1162 = vpop.f32.mrb[0].mxu0
    %1163 = vmatprep.mubr.bf16.mxu0 0
    %1164 = vmatmul.mubr.bf16.gmra.mrb[0].mxu0 %v1110
    %v1165 = vpop.f32.mrb[0].mxu0
    %v1166 = vadd.f32 %v1077, %v1165
    %v1167 = vpop.f32.mrb[0].mxu0
    %v1168 = vpop.f32.mrb[0].mxu0
    %v1169 = vadd.f32 %v1077, %v1168
    %v1170 = vpop.f32.mrb[0].mxu0
    %1171 = vmatprep.mubr.bf16.mxu0 0
    %1172 = vmatmul.mubr.bf16.gmra.mrb[0].mxu0 %v1113
    %v1173 = vpop.f32.mrb[0].mxu0
    %v1174 = vadd.f32 %v1077, %v1173
    %v1175 = vpop.f32.mrb[0].mxu0
    %v1176 = vpop.f32.mrb[0].mxu0
    %v1177 = vadd.f32 %v1077, %v1176
    %v1178 = vpop.f32.mrb[0].mxu0
    %1179 = vdwg.mxu0
    %1180 = vst [vmem:[#allocation12] sm:$0xff] %v1150
    %1181 = vst [vmem:[#allocation12 + $0x8] sm:$0xff] %v1153
    %1182 = vst [vmem:[#allocation12 + $0x10] sm:$0xff] %v1158
    %1183 = vst [vmem:[#allocation12 + $0x18] sm:$0xff] %v1161
    %1184 = vst [vmem:[#allocation12 + $0x20] sm:$0xff] %v1166
    %1185 = vst [vmem:[#allocation12 + $0x28] sm:$0xff] %v1169
    %1186 = vst [vmem:[#allocation12 + $0x30] sm:$0xff] %v1174
    %1187 = vst [vmem:[#allocation12 + $0x38] sm:$0xff] %v1177
    // Predicated region
    $region42: #{tpu_custom_call.1} parent=1 // pred_check
      _
    $region43: #{tpu_custom_call.1} parent=1 // pred_check_branch
      %1189 = sbr.rel (0) target = $region45
    $region44: #{tpu_custom_call.1} parent=1 // pred_region
      %s1191 = ssub.s32 1024, 1024
      %1192 = vsyncadd [#allocation6], %s1191
      %s1193 = sshll.u32 [#allocation12], 4
      %s1194 = int_to_ptr.vmem [resolvable:$true] %s1193
      %1199 = dma.vmem_to_hbm [thread:$0]  %s1194, 1024, %s6, [#allocation6], 128, 128, 8
    $region45: #{tpu_custom_call.1} parent=1 // pred_fallthru
      _
    // Predicated region
    $region46: #{tpu_custom_call.1} parent=1 // pred_check
      _
    $region47: #{tpu_custom_call.1} parent=1 // pred_check_branch
      %1201 = sbr.rel (0) target = $region49
    $region48: #{tpu_custom_call.1} parent=1 // pred_region
      %1202 = dma.done [#allocation6], 1024
    $region49: #{tpu_custom_call.1} parent=1 // pred_fallthru
      _
    %1203 = vsyncpa [#allocation5], 1
    %1204 = vsyncpa [#allocation8], 1
    %1205 = vsyncpa [#allocation11], 1
    %1206 = vsyncpa [#allocation6], 1

</llo_original>
